<compile_context>
chip_gen: v6e
topology: v6e:2x2x1
jax: 0.10.0
libtpu: 0.0.40
codegen_flags: <defaults>
</compile_context>

<pallas_src>
import functools

import jax
import jax.numpy as jnp
from jax.experimental import pallas as pl
from jax.experimental.pallas import tpu as pltpu  # noqa: F401  (TPU backend)


# ----------------------------------------------------------------------------
# Pallas kernels (one fused kernel per layer)
# ----------------------------------------------------------------------------
def _conv_act_kernel(w_ref, p_ref, o_ref, *, act):
    """o = act(W @ P).  W:(Cout,K) bf16, P:(K,M) bf16, o:(Cout,M)."""
    y = jnp.dot(w_ref[...], p_ref[...], preferred_element_type=jnp.float32)
    if act == "leaky":
        y = jnp.where(y >= 0.0, y, 0.2 * y)
    elif act == "sigmoid":
        y = jax.nn.sigmoid(y)
    o_ref[...] = y.astype(o_ref.dtype)


def _conv_bn_lrelu_kernel(w_ref, p_ref, g_ref, b_ref, o_ref):
    """o = LeakyReLU_0.2(BN_train(W @ P)); per-channel stats over the M axis."""
    y = jnp.dot(w_ref[...], p_ref[...], preferred_element_type=jnp.float32)
    m = y.shape[1]
    mean = jnp.sum(y, axis=1, keepdims=True) * (1.0 / m)
    d = y - mean
    var = jnp.sum(d * d, axis=1, keepdims=True) * (1.0 / m)  # biased, as PyTorch fwd
    z = d * jax.lax.rsqrt(var + 1e-5) * g_ref[...] + b_ref[...]
    o_ref[...] = jnp.where(z >= 0.0, z, 0.2 * z).astype(o_ref.dtype)


# ----------------------------------------------------------------------------
# Glue: channel-major im2col + single-block pallas_call wrapper
# ----------------------------------------------------------------------------
def _im2col_cm(a_cm, n, h, w, kernel, stride, pad):
    """a_cm: (C, N*H*W) -> patches (C*k*k, N*OH*OW), plus OH, OW.

    Patch row order is (c, kh, kw), matching PyTorch weight.reshape(Cout, -1),
    so no weight transpose is needed.  No full-tensor transposes here.
    """
    c = a_cm.shape[0]
    a = a_cm.reshape(c, n, h, w)
    ap = jnp.pad(a, ((0, 0), (0, 0), (pad, pad), (pad, pad)))
    oh = (h + 2 * pad - kernel) // stride + 1
    ow = (w + 2 * pad - kernel) // stride + 1
    cols = []
    for kh in range(kernel):
        for kw in range(kernel):
            cols.append(ap[:, :, kh:kh + stride * oh:stride,
                               kw:kw + stride * ow:stride])
    p = jnp.stack(cols, axis=1)                       # (C, k*k, N, OH, OW)
    return p.reshape(c * kernel * kernel, n * oh * ow), oh, ow


def _fused_layer(wm, patches, gamma=None, beta=None, act="leaky",
                 out_dtype=jnp.bfloat16):
    """One pallas_call per layer: GEMM (+ BN) (+ activation), single block."""
    cout, k = wm.shape
    k2, m = patches.shape
    assert k2 == k
    # Single full-array block per operand; guard that it actually fits VMEM
    # (budgeted for v7x's smaller 64 MiB VMEM / 32 MiB scoped default).
    # TODO(synk): at production sizes (nf=64, batch>=64), tile M with a grid
    # and switch BN to an accumulate-then-finalize (pl.when) two-pass reduction.
    footprint = 2 * (cout * k + k * m + cout * m) * 4
    assert footprint < 24 * 1024 * 1024, "single-block layer would not fit VMEM"

    if gamma is None:
        kernel = functools.partial(_conv_act_kernel, act=act)
        operands = (wm, patches)
        in_specs = [
            pl.BlockSpec((cout, k), lambda: (0, 0)),
            pl.BlockSpec((k, m), lambda: (0, 0)),
        ]
    else:
        kernel = _conv_bn_lrelu_kernel
        operands = (wm, patches, gamma, beta)
        in_specs = [
            pl.BlockSpec((cout, k), lambda: (0, 0)),
            pl.BlockSpec((k, m), lambda: (0, 0)),
            pl.BlockSpec((cout, 1), lambda: (0, 0)),
            pl.BlockSpec((cout, 1), lambda: (0, 0)),
        ]

    return pl.pallas_call(
        kernel,
        out_shape=jax.ShapeDtypeStruct((cout, m), out_dtype),
        in_specs=in_specs,
        out_specs=pl.BlockSpec((cout, m), lambda: (0, 0)),
    )(*operands)


# ----------------------------------------------------------------------------
# Parameters
# ----------------------------------------------------------------------------
def init_params(key, num_features=8, num_channels=3):
    """Raw PyTorch-shaped parameters: (Cout, Cin, 4, 4) weights, BN gamma/beta."""
    nf, nc = num_features, num_channels
    ks = jax.random.split(key, 8)
    return {
        "w1": 0.02 * jax.random.normal(ks[0], (nf, nc, 4, 4), jnp.float32),
        "w2": 0.02 * jax.random.normal(ks[1], (nf * 2, nf, 4, 4), jnp.float32),
        "w3": 0.02 * jax.random.normal(ks[2], (nf * 4, nf * 2, 4, 4), jnp.float32),
        "w4": 0.02 * jax.random.normal(ks[3], (nf * 8, nf * 4, 4, 4), jnp.float32),
        "w5": 0.02 * jax.random.normal(ks[4], (1, nf * 8, 4, 4), jnp.float32),
        "g2": 1.0 + 0.01 * jax.random.normal(ks[5], (nf * 2,), jnp.float32),
        "b2": jnp.zeros((nf * 2,), jnp.float32),
        "g3": 1.0 + 0.01 * jax.random.normal(ks[6], (nf * 4,), jnp.float32),
        "b3": jnp.zeros((nf * 4,), jnp.float32),
        "g4": 1.0 + 0.01 * jax.random.normal(ks[7], (nf * 8,), jnp.float32),
        "b4": jnp.zeros((nf * 8,), jnp.float32),
    }


def prepare_params(raw):
    """One-time weight reorder/cast, outside the forward pass."""
    prepped = {}
    for i in range(1, 6):
        w = raw[f"w{i}"]
        # PyTorch (Cout, Cin, K, K) -> GEMM matrix (Cout, Cin*K*K), bf16 for MXU.
        prepped[f"w{i}m"] = w.reshape(w.shape[0], -1).astype(jnp.bfloat16)
    for i in (2, 3, 4):
        prepped[f"g{i}"] = raw[f"g{i}"].reshape(-1, 1).astype(jnp.float32)
        prepped[f"b{i}"] = raw[f"b{i}"].reshape(-1, 1).astype(jnp.float32)
    return prepped


# ----------------------------------------------------------------------------
# Discriminator forward
# ----------------------------------------------------------------------------
def discriminator_forward(x, params):
    """x: (N, C, 64, 64) NCHW float32 -> (N, 1, 1, 1) probabilities."""
    n, c, h, w = x.shape
    # Single small input transpose to channel-major (C, N*H*W); bf16 thereafter.
    a = jnp.transpose(x, (1, 0, 2, 3)).reshape(c, n * h * w).astype(jnp.bfloat16)

    # Layer 1: Conv(4,2,1) + LeakyReLU (fused)
    p, h, w = _im2col_cm(a, n, h, w, 4, 2, 1)
    a = _fused_layer(params["w1m"], p, act="leaky")

    # Layers 2-4: Conv(4,2,1) + BatchNorm(train) + LeakyReLU, each one kernel
    for i in (2, 3, 4):
        p, h, w = _im2col_cm(a, n, h, w, 4, 2, 1)
        a = _fused_layer(params[f"w{i}m"], p, params[f"g{i}"], params[f"b{i}"])

    # Layer 5: Conv(4,1,0) + Sigmoid -> (1, N)
    p, h, w = _im2col_cm(a, n, h, w, 4, 1, 0)
    y = _fused_layer(params["w5m"], p, act="sigmoid", out_dtype=jnp.float32)
    return y.reshape(1, n, 1, 1).transpose(1, 0, 2, 3)   # (N, 1, 1, 1)


# ----------------------------------------------------------------------------
if __name__ == "__main__":
    key = jax.random.PRNGKey(0)
    kx, kp = jax.random.split(key)

    # Spatial 64x64 is required by the architecture (final 4x4/valid conv -> 1x1).
    # Channel widths are shrunk (num_features=8, num_channels=3) to keep it small.
    batch, num_channels, num_features, spatial = 2, 3, 8, 64
    x = jax.random.normal(kx, (batch, num_channels, spatial, spatial), jnp.float32)
    raw = init_params(kp, num_features=num_features, num_channels=num_channels)
    params = prepare_params(raw)

    fwd = jax.jit(discriminator_forward)
    out = jax.block_until_ready(fwd(x, params))

    assert out.shape == (batch, 1, 1, 1), out.shape
    assert bool(jnp.all(jnp.isfinite(out)))
    assert bool(jnp.all((out >= 0.0) & (out <= 1.0)))
    print("KERNEL_OK")
</pallas_src>

<mosaic_0001>
module attributes {stable_mosaic.version = 11 : i64} {
  func.func @_conv_act_kernel(%arg0: memref<8x48xbf16, #tpu.memory_space<vmem>>, %arg1: memref<48x2048xbf16, #tpu.memory_space<vmem>>, %arg2: memref<8x2048xbf16, #tpu.memory_space<vmem>>) attributes {dimension_semantics = [], scalar_prefetch = 0 : i64, scratch_operands = 0 : i64, tpu.core_type = #tpu.core_type<tc>} {
    %c0 = arith.constant 0 : index
    %c0_0 = arith.constant 0 : index
    %0 = vector.load %arg0[%c0, %c0_0] : memref<8x48xbf16, #tpu.memory_space<vmem>>, vector<8x48xbf16>
    %c0_1 = arith.constant 0 : index
    %c0_2 = arith.constant 0 : index
    %1 = vector.load %arg1[%c0_1, %c0_2] : memref<48x2048xbf16, #tpu.memory_space<vmem>>, vector<48x2048xbf16>
    %cst = arith.constant dense<0.000000e+00> : vector<8x2048xf32>
    %2 = tpu.matmul %0, %1, %cst {dimension_numbers = #tpu.dot_dimension_numbers<[1], [0], [0], [1], [0, 0, 1, 1], [], []>} : vector<8x48xbf16>, vector<48x2048xbf16>, vector<8x2048xf32> -> vector<8x2048xf32>
    %cst_3 = arith.constant 0.000000e+00 : f32
    %3 = vector.broadcast %cst_3 : f32 to vector<8x2048xf32>
    %4 = arith.cmpf oge, %2, %3 : vector<8x2048xf32>
    %cst_4 = arith.constant 2.000000e-01 : f32
    %5 = vector.broadcast %cst_4 : f32 to vector<8x2048xf32>
    %6 = arith.mulf %5, %2 : vector<8x2048xf32>
    %7 = arith.select %4, %2, %6 : vector<8x2048xi1>, vector<8x2048xf32>
    %8 = arith.truncf %7 : vector<8x2048xf32> to vector<8x2048xbf16>
    %c0_5 = arith.constant 0 : index
    %c0_6 = arith.constant 0 : index
    %9 = vector.load %arg2[%c0_5, %c0_6] : memref<8x2048xbf16, #tpu.memory_space<vmem>>, vector<8x2048xbf16>
    tpu.vector_store %arg2[%c0_5, %c0_6], %8 {strides = array<i32>} : memref<8x2048xbf16, #tpu.memory_space<vmem>>, vector<8x2048xbf16>,
    return
  }
}

module attributes {stable_mosaic.version = 11 : i64} {
  func.func @_conv_bn_lrelu_kernel(%arg0: memref<16x128xbf16, #tpu.memory_space<vmem>>, %arg1: memref<128x512xbf16, #tpu.memory_space<vmem>>, %arg2: memref<16x1xf32, #tpu.memory_space<vmem>>, %arg3: memref<16x1xf32, #tpu.memory_space<vmem>>, %arg4: memref<16x512xbf16, #tpu.memory_space<vmem>>) attributes {dimension_semantics = [], scalar_prefetch = 0 : i64, scratch_operands = 0 : i64, tpu.core_type = #tpu.core_type<tc>} {
    %c0 = arith.constant 0 : index
    %c0_0 = arith.constant 0 : index
    %0 = vector.load %arg0[%c0, %c0_0] : memref<16x128xbf16, #tpu.memory_space<vmem>>, vector<16x128xbf16>
    %c0_1 = arith.constant 0 : index
    %c0_2 = arith.constant 0 : index
    %1 = vector.load %arg1[%c0_1, %c0_2] : memref<128x512xbf16, #tpu.memory_space<vmem>>, vector<128x512xbf16>
    %cst = arith.constant dense<0.000000e+00> : vector<16x512xf32>
    %2 = tpu.matmul %0, %1, %cst {dimension_numbers = #tpu.dot_dimension_numbers<[1], [0], [0], [1], [0, 0, 1, 1], [], []>} : vector<16x128xbf16>, vector<128x512xbf16>, vector<16x512xf32> -> vector<16x512xf32>
    %cst_3 = arith.constant dense<0.000000e+00> : vector<16xf32>
    %3 = vector.multi_reduction <add>, %2, %cst_3 [1] : vector<16x512xf32> to vector<16xf32>
    %4 = vector.shape_cast %3 : vector<16xf32> to vector<16x1xf32>
    %cst_4 = arith.constant 0.001953125 : f32
    %5 = vector.broadcast %cst_4 : f32 to vector<16x1xf32>
    %6 = arith.mulf %4, %5 : vector<16x1xf32>
    %7 = vector.broadcast %6 : vector<16x1xf32> to vector<16x512xf32>
    %8 = arith.subf %2, %7 : vector<16x512xf32>
    %9 = arith.mulf %8, %8 : vector<16x512xf32>
    %cst_5 = arith.constant dense<0.000000e+00> : vector<16xf32>
    %10 = vector.multi_reduction <add>, %9, %cst_5 [1] : vector<16x512xf32> to vector<16xf32>
    %11 = vector.shape_cast %10 : vector<16xf32> to vector<16x1xf32>
    %cst_6 = arith.constant 0.001953125 : f32
    %12 = vector.broadcast %cst_6 : f32 to vector<16x1xf32>
    %13 = arith.mulf %11, %12 : vector<16x1xf32>
    %cst_7 = arith.constant 9.99999974E-6 : f32
    %14 = vector.broadcast %cst_7 : f32 to vector<16x1xf32>
    %15 = arith.addf %13, %14 : vector<16x1xf32>
    %16 = math.rsqrt %15 : vector<16x1xf32>
    %17 = vector.broadcast %16 : vector<16x1xf32> to vector<16x512xf32>
    %18 = arith.mulf %8, %17 : vector<16x512xf32>
    %c0_8 = arith.constant 0 : index
    %c0_9 = arith.constant 0 : index
    %19 = vector.load %arg2[%c0_8, %c0_9] : memref<16x1xf32, #tpu.memory_space<vmem>>, vector<16x1xf32>
    %20 = vector.broadcast %19 : vector<16x1xf32> to vector<16x512xf32>
    %21 = arith.mulf %18, %20 : vector<16x512xf32>
    %c0_10 = arith.constant 0 : index
    %c0_11 = arith.constant 0 : index
    %22 = vector.load %arg3[%c0_10, %c0_11] : memref<16x1xf32, #tpu.memory_space<vmem>>, vector<16x1xf32>
    %23 = vector.broadcast %22 : vector<16x1xf32> to vector<16x512xf32>
    %24 = arith.addf %21, %23 : vector<16x512xf32>
    %cst_12 = arith.constant 0.000000e+00 : f32
    %25 = vector.broadcast %cst_12 : f32 to vector<16x512xf32>
    %26 = arith.cmpf oge, %24, %25 : vector<16x512xf32>
    %cst_13 = arith.constant 2.000000e-01 : f32
    %27 = vector.broadcast %cst_13 : f32 to vector<16x512xf32>
    %28 = arith.mulf %27, %24 : vector<16x512xf32>
    %29 = arith.select %26, %24, %28 : vector<16x512xi1>, vector<16x512xf32>
    %30 = arith.truncf %29 : vector<16x512xf32> to vector<16x512xbf16>
    %c0_14 = arith.constant 0 : index
    %c0_15 = arith.constant 0 : index
    %31 = vector.load %arg4[%c0_14, %c0_15] : memref<16x512xbf16, #tpu.memory_space<vmem>>, vector<16x512xbf16>
    tpu.vector_store %arg4[%c0_14, %c0_15], %30 {strides = array<i32>} : memref<16x512xbf16, #tpu.memory_space<vmem>>, vector<16x512xbf16>,
    return
  }
}

module attributes {stable_mosaic.version = 11 : i64} {
  func.func @_conv_bn_lrelu_kernel(%arg0: memref<32x256xbf16, #tpu.memory_space<vmem>>, %arg1: memref<256x128xbf16, #tpu.memory_space<vmem>>, %arg2: memref<32x1xf32, #tpu.memory_space<vmem>>, %arg3: memref<32x1xf32, #tpu.memory_space<vmem>>, %arg4: memref<32x128xbf16, #tpu.memory_space<vmem>>) attributes {dimension_semantics = [], scalar_prefetch = 0 : i64, scratch_operands = 0 : i64, tpu.core_type = #tpu.core_type<tc>} {
    %c0 = arith.constant 0 : index
    %c0_0 = arith.constant 0 : index
    %0 = vector.load %arg0[%c0, %c0_0] : memref<32x256xbf16, #tpu.memory_space<vmem>>, vector<32x256xbf16>
    %c0_1 = arith.constant 0 : index
    %c0_2 = arith.constant 0 : index
    %1 = vector.load %arg1[%c0_1, %c0_2] : memref<256x128xbf16, #tpu.memory_space<vmem>>, vector<256x128xbf16>
    %cst = arith.constant dense<0.000000e+00> : vector<32x128xf32>
    %2 = tpu.matmul %0, %1, %cst {dimension_numbers = #tpu.dot_dimension_numbers<[1], [0], [0], [1], [0, 0, 1, 1], [], []>} : vector<32x256xbf16>, vector<256x128xbf16>, vector<32x128xf32> -> vector<32x128xf32>
    %cst_3 = arith.constant dense<0.000000e+00> : vector<32xf32>
    %3 = vector.multi_reduction <add>, %2, %cst_3 [1] : vector<32x128xf32> to vector<32xf32>
    %4 = vector.shape_cast %3 : vector<32xf32> to vector<32x1xf32>
    %cst_4 = arith.constant 7.812500e-03 : f32
    %5 = vector.broadcast %cst_4 : f32 to vector<32x1xf32>
    %6 = arith.mulf %4, %5 : vector<32x1xf32>
    %7 = vector.broadcast %6 : vector<32x1xf32> to vector<32x128xf32>
    %8 = arith.subf %2, %7 : vector<32x128xf32>
    %9 = arith.mulf %8, %8 : vector<32x128xf32>
    %cst_5 = arith.constant dense<0.000000e+00> : vector<32xf32>
    %10 = vector.multi_reduction <add>, %9, %cst_5 [1] : vector<32x128xf32> to vector<32xf32>
    %11 = vector.shape_cast %10 : vector<32xf32> to vector<32x1xf32>
    %cst_6 = arith.constant 7.812500e-03 : f32
    %12 = vector.broadcast %cst_6 : f32 to vector<32x1xf32>
    %13 = arith.mulf %11, %12 : vector<32x1xf32>
    %cst_7 = arith.constant 9.99999974E-6 : f32
    %14 = vector.broadcast %cst_7 : f32 to vector<32x1xf32>
    %15 = arith.addf %13, %14 : vector<32x1xf32>
    %16 = math.rsqrt %15 : vector<32x1xf32>
    %17 = vector.broadcast %16 : vector<32x1xf32> to vector<32x128xf32>
    %18 = arith.mulf %8, %17 : vector<32x128xf32>
    %c0_8 = arith.constant 0 : index
    %c0_9 = arith.constant 0 : index
    %19 = vector.load %arg2[%c0_8, %c0_9] : memref<32x1xf32, #tpu.memory_space<vmem>>, vector<32x1xf32>
    %20 = vector.broadcast %19 : vector<32x1xf32> to vector<32x128xf32>
    %21 = arith.mulf %18, %20 : vector<32x128xf32>
    %c0_10 = arith.constant 0 : index
    %c0_11 = arith.constant 0 : index
    %22 = vector.load %arg3[%c0_10, %c0_11] : memref<32x1xf32, #tpu.memory_space<vmem>>, vector<32x1xf32>
    %23 = vector.broadcast %22 : vector<32x1xf32> to vector<32x128xf32>
    %24 = arith.addf %21, %23 : vector<32x128xf32>
    %cst_12 = arith.constant 0.000000e+00 : f32
    %25 = vector.broadcast %cst_12 : f32 to vector<32x128xf32>
    %26 = arith.cmpf oge, %24, %25 : vector<32x128xf32>
    %cst_13 = arith.constant 2.000000e-01 : f32
    %27 = vector.broadcast %cst_13 : f32 to vector<32x128xf32>
    %28 = arith.mulf %27, %24 : vector<32x128xf32>
    %29 = arith.select %26, %24, %28 : vector<32x128xi1>, vector<32x128xf32>
    %30 = arith.truncf %29 : vector<32x128xf32> to vector<32x128xbf16>
    %c0_14 = arith.constant 0 : index
    %c0_15 = arith.constant 0 : index
    %31 = vector.load %arg4[%c0_14, %c0_15] : memref<32x128xbf16, #tpu.memory_space<vmem>>, vector<32x128xbf16>
    tpu.vector_store %arg4[%c0_14, %c0_15], %30 {strides = array<i32>} : memref<32x128xbf16, #tpu.memory_space<vmem>>, vector<32x128xbf16>,
    return
  }
}

module attributes {stable_mosaic.version = 11 : i64} {
  func.func @_conv_bn_lrelu_kernel(%arg0: memref<64x512xbf16, #tpu.memory_space<vmem>>, %arg1: memref<512x32xbf16, #tpu.memory_space<vmem>>, %arg2: memref<64x1xf32, #tpu.memory_space<vmem>>, %arg3: memref<64x1xf32, #tpu.memory_space<vmem>>, %arg4: memref<64x32xbf16, #tpu.memory_space<vmem>>) attributes {dimension_semantics = [], scalar_prefetch = 0 : i64, scratch_operands = 0 : i64, tpu.core_type = #tpu.core_type<tc>} {
    %c0 = arith.constant 0 : index
    %c0_0 = arith.constant 0 : index
    %0 = vector.load %arg0[%c0, %c0_0] : memref<64x512xbf16, #tpu.memory_space<vmem>>, vector<64x512xbf16>
    %c0_1 = arith.constant 0 : index
    %c0_2 = arith.constant 0 : index
    %1 = vector.load %arg1[%c0_1, %c0_2] : memref<512x32xbf16, #tpu.memory_space<vmem>>, vector<512x32xbf16>
    %cst = arith.constant dense<0.000000e+00> : vector<64x32xf32>
    %2 = tpu.matmul %0, %1, %cst {dimension_numbers = #tpu.dot_dimension_numbers<[1], [0], [0], [1], [0, 0, 1, 1], [], []>} : vector<64x512xbf16>, vector<512x32xbf16>, vector<64x32xf32> -> vector<64x32xf32>
    %cst_3 = arith.constant dense<0.000000e+00> : vector<64xf32>
    %3 = vector.multi_reduction <add>, %2, %cst_3 [1] : vector<64x32xf32> to vector<64xf32>
    %4 = vector.shape_cast %3 : vector<64xf32> to vector<64x1xf32>
    %cst_4 = arith.constant 3.125000e-02 : f32
    %5 = vector.broadcast %cst_4 : f32 to vector<64x1xf32>
    %6 = arith.mulf %4, %5 : vector<64x1xf32>
    %7 = vector.broadcast %6 : vector<64x1xf32> to vector<64x32xf32>
    %8 = arith.subf %2, %7 : vector<64x32xf32>
    %9 = arith.mulf %8, %8 : vector<64x32xf32>
    %cst_5 = arith.constant dense<0.000000e+00> : vector<64xf32>
    %10 = vector.multi_reduction <add>, %9, %cst_5 [1] : vector<64x32xf32> to vector<64xf32>
    %11 = vector.shape_cast %10 : vector<64xf32> to vector<64x1xf32>
    %cst_6 = arith.constant 3.125000e-02 : f32
    %12 = vector.broadcast %cst_6 : f32 to vector<64x1xf32>
    %13 = arith.mulf %11, %12 : vector<64x1xf32>
    %cst_7 = arith.constant 9.99999974E-6 : f32
    %14 = vector.broadcast %cst_7 : f32 to vector<64x1xf32>
    %15 = arith.addf %13, %14 : vector<64x1xf32>
    %16 = math.rsqrt %15 : vector<64x1xf32>
    %17 = vector.broadcast %16 : vector<64x1xf32> to vector<64x32xf32>
    %18 = arith.mulf %8, %17 : vector<64x32xf32>
    %c0_8 = arith.constant 0 : index
    %c0_9 = arith.constant 0 : index
    %19 = vector.load %arg2[%c0_8, %c0_9] : memref<64x1xf32, #tpu.memory_space<vmem>>, vector<64x1xf32>
    %20 = vector.broadcast %19 : vector<64x1xf32> to vector<64x32xf32>
    %21 = arith.mulf %18, %20 : vector<64x32xf32>
    %c0_10 = arith.constant 0 : index
    %c0_11 = arith.constant 0 : index
    %22 = vector.load %arg3[%c0_10, %c0_11] : memref<64x1xf32, #tpu.memory_space<vmem>>, vector<64x1xf32>
    %23 = vector.broadcast %22 : vector<64x1xf32> to vector<64x32xf32>
    %24 = arith.addf %21, %23 : vector<64x32xf32>
    %cst_12 = arith.constant 0.000000e+00 : f32
    %25 = vector.broadcast %cst_12 : f32 to vector<64x32xf32>
    %26 = arith.cmpf oge, %24, %25 : vector<64x32xf32>
    %cst_13 = arith.constant 2.000000e-01 : f32
    %27 = vector.broadcast %cst_13 : f32 to vector<64x32xf32>
    %28 = arith.mulf %27, %24 : vector<64x32xf32>
    %29 = arith.select %26, %24, %28 : vector<64x32xi1>, vector<64x32xf32>
    %30 = arith.truncf %29 : vector<64x32xf32> to vector<64x32xbf16>
    %c0_14 = arith.constant 0 : index
    %c0_15 = arith.constant 0 : index
    %31 = vector.load %arg4[%c0_14, %c0_15] : memref<64x32xbf16, #tpu.memory_space<vmem>>, vector<64x32xbf16>
    tpu.vector_store %arg4[%c0_14, %c0_15], %30 {strides = array<i32>} : memref<64x32xbf16, #tpu.memory_space<vmem>>, vector<64x32xbf16>,
    return
  }
}

module attributes {stable_mosaic.version = 11 : i64} {
  func.func @_conv_act_kernel(%arg0: memref<1x1024xbf16, #tpu.memory_space<vmem>>, %arg1: memref<1024x2xbf16, #tpu.memory_space<vmem>>, %arg2: memref<1x2xf32, #tpu.memory_space<vmem>>) attributes {dimension_semantics = [], scalar_prefetch = 0 : i64, scratch_operands = 0 : i64, tpu.core_type = #tpu.core_type<tc>} {
    %c0 = arith.constant 0 : index
    %c0_0 = arith.constant 0 : index
    %0 = vector.load %arg0[%c0, %c0_0] : memref<1x1024xbf16, #tpu.memory_space<vmem>>, vector<1x1024xbf16>
    %c0_1 = arith.constant 0 : index
    %c0_2 = arith.constant 0 : index
    %1 = vector.load %arg1[%c0_1, %c0_2] : memref<1024x2xbf16, #tpu.memory_space<vmem>>, vector<1024x2xbf16>
    %cst = arith.constant dense<0.000000e+00> : vector<1x2xf32>
    %2 = tpu.matmul %0, %1, %cst {dimension_numbers = #tpu.dot_dimension_numbers<[1], [0], [0], [1], [0, 0, 1, 1], [], []>} : vector<1x1024xbf16>, vector<1024x2xbf16>, vector<1x2xf32> -> vector<1x2xf32>
    %3 = arith.negf %2 : vector<1x2xf32>
    %4 = math.exp %3 : vector<1x2xf32>
    %cst_3 = arith.constant 1.000000e+00 : f32
    %5 = vector.broadcast %cst_3 : f32 to vector<1x2xf32>
    %6 = arith.addf %5, %4 : vector<1x2xf32>
    %7 = arith.divf %5, %6 : vector<1x2xf32>
    %c0_4 = arith.constant 0 : index
    %c0_5 = arith.constant 0 : index
    %8 = vector.load %arg2[%c0_4, %c0_5] : memref<1x2xf32, #tpu.memory_space<vmem>>, vector<1x2xf32>
    tpu.vector_store %arg2[%c0_4, %c0_5], %7 {strides = array<i32>} : memref<1x2xf32, #tpu.memory_space<vmem>>, vector<1x2xf32>,
    return
  }
}

</mosaic_0001>

<llo_original>
// kernel: discriminator_forward.5
$region0: #{discriminator_forward.5}
  #allocation0 [shape = 'u32[]', space=smem, size = 0x4, offset = 0x4, fixed_abs, tag = 'smem constant byte address 0x4 - core index']
  #allocation1 [shape = 'u32[144,128]{1,0:T(1,128)}', space=vmem, size = 0x12000, scoped, tag = 'internal scratch']
  %s0 = inlined_call_operand.vmem [shape: bf16[8,48], index: 0, kind: input, shape index: {}]
  %s1 = inlined_call_operand.vmem [shape: bf16[48,2048], index: 1, kind: input, shape index: {}]
  %s2 = inlined_call_operand.vmem [shape: bf16[8,2048], index: 2, kind: output, shape index: {}]
  %s3 = sld [smem:[#allocation0]]
  $region18: #{discriminator_forward.5} parent=0
    _
  %s5 = ssub.s32 1, %s3
  %s6 = scalar_select 0, %s5, %s3
  // Predicated region
  $region2: #{discriminator_forward.5} parent=0 // pred_check
    _
  $region3: #{discriminator_forward.5} parent=0 // pred_check_branch
    %8 = sbr.rel (0) target = $region5
  $region4: #{discriminator_forward.5} parent=0 // pred_region
    _
  $region5: #{discriminator_forward.5} parent=0 // pred_fallthru
    _
  // Predicated region
  $region6: #{discriminator_forward.5} parent=0 // pred_check
    _
  $region7: #{discriminator_forward.5} parent=0 // pred_check_branch
    %10 = sbr.rel (0) target = $region9
  $region8: #{discriminator_forward.5} parent=0 // pred_region
    _
  $region9: #{discriminator_forward.5} parent=0 // pred_fallthru
    _
  %v12 = vld [vmem:[%s0] sm:$0xf]
  %v13 = vld [vmem:[%s1] sm:$0xff]
  %v14 = vld [vmem:[%s1 + $0x8] sm:$0xff]
  %v15 = vld [vmem:[%s1 + $0x10] sm:$0xff]
  %v16 = vld [vmem:[%s1 + $0x18] sm:$0xff]
  %v17 = vld [vmem:[%s1 + $0x20] sm:$0xff]
  %v18 = vld [vmem:[%s1 + $0x28] sm:$0xff]
  %v19 = vld [vmem:[%s1 + $0x30] sm:$0xff]
  %v20 = vld [vmem:[%s1 + $0x38] sm:$0xff]
  %v21 = vld [vmem:[%s1 + $0x40] sm:$0xff]
  %v22 = vld [vmem:[%s1 + $0x48] sm:$0xff]
  %v23 = vld [vmem:[%s1 + $0x50] sm:$0xff]
  %v24 = vld [vmem:[%s1 + $0x58] sm:$0xff]
  %v25 = vld [vmem:[%s1 + $0x60] sm:$0xff]
  %v26 = vld [vmem:[%s1 + $0x68] sm:$0xff]
  %v27 = vld [vmem:[%s1 + $0x70] sm:$0xff]
  %v28 = vld [vmem:[%s1 + $0x78] sm:$0xff]
  %v29 = vld [vmem:[%s1 + $0x80] sm:$0xff]
  %v30 = vld [vmem:[%s1 + $0x88] sm:$0xff]
  %v31 = vld [vmem:[%s1 + $0x90] sm:$0xff]
  %v32 = vld [vmem:[%s1 + $0x98] sm:$0xff]
  %v33 = vld [vmem:[%s1 + $0xa0] sm:$0xff]
  %v34 = vld [vmem:[%s1 + $0xa8] sm:$0xff]
  %v35 = vld [vmem:[%s1 + $0xb0] sm:$0xff]
  %v36 = vld [vmem:[%s1 + $0xb8] sm:$0xff]
  %v37 = vld [vmem:[%s1 + $0xc0] sm:$0xff]
  %v38 = vld [vmem:[%s1 + $0xc8] sm:$0xff]
  %v39 = vld [vmem:[%s1 + $0xd0] sm:$0xff]
  %v40 = vld [vmem:[%s1 + $0xd8] sm:$0xff]
  %v41 = vld [vmem:[%s1 + $0xe0] sm:$0xff]
  %v42 = vld [vmem:[%s1 + $0xe8] sm:$0xff]
  %v43 = vld [vmem:[%s1 + $0xf0] sm:$0xff]
  %v44 = vld [vmem:[%s1 + $0xf8] sm:$0xff]
  %v45 = vld [vmem:[%s1 + $0x100] sm:$0xff]
  %v46 = vld [vmem:[%s1 + $0x108] sm:$0xff]
  %v47 = vld [vmem:[%s1 + $0x110] sm:$0xff]
  %v48 = vld [vmem:[%s1 + $0x118] sm:$0xff]
  %v49 = vld [vmem:[%s1 + $0x120] sm:$0xff]
  %v50 = vld [vmem:[%s1 + $0x128] sm:$0xff]
  %v51 = vld [vmem:[%s1 + $0x130] sm:$0xff]
  %v52 = vld [vmem:[%s1 + $0x138] sm:$0xff]
  %v53 = vld [vmem:[%s1 + $0x140] sm:$0xff]
  %v54 = vld [vmem:[%s1 + $0x148] sm:$0xff]
  %v55 = vld [vmem:[%s1 + $0x150] sm:$0xff]
  %v56 = vld [vmem:[%s1 + $0x158] sm:$0xff]
  %v57 = vld [vmem:[%s1 + $0x160] sm:$0xff]
  %v58 = vld [vmem:[%s1 + $0x168] sm:$0xff]
  %v59 = vld [vmem:[%s1 + $0x170] sm:$0xff]
  %v60 = vld [vmem:[%s1 + $0x178] sm:$0xff]
  %v109 = vunpack.c.l.b16 %v13
  %v110 = vunpack.c.h.b16 %v13
  %v111 = vunpack.c.l.b16 %v14
  %v112 = vunpack.c.h.b16 %v14
  %v113 = vunpack.c.l.b16 %v15
  %v114 = vunpack.c.h.b16 %v15
  %v115 = vunpack.c.l.b16 %v16
  %v116 = vunpack.c.h.b16 %v16
  %v117 = vunpack.c.l.b16 %v17
  %v118 = vunpack.c.h.b16 %v17
  %v119 = vunpack.c.l.b16 %v18
  %v120 = vunpack.c.h.b16 %v18
  %v121 = vunpack.c.l.b16 %v19
  %v122 = vunpack.c.h.b16 %v19
  %v123 = vunpack.c.l.b16 %v20
  %v124 = vunpack.c.h.b16 %v20
  %v125 = vunpack.c.l.b16 %v21
  %v126 = vunpack.c.h.b16 %v21
  %v127 = vunpack.c.l.b16 %v22
  %v128 = vunpack.c.h.b16 %v22
  %v129 = vunpack.c.l.b16 %v23
  %v130 = vunpack.c.h.b16 %v23
  %v131 = vunpack.c.l.b16 %v24
  %v132 = vunpack.c.h.b16 %v24
  %v133 = vunpack.c.l.b16 %v25
  %v134 = vunpack.c.h.b16 %v25
  %v135 = vunpack.c.l.b16 %v26
  %v136 = vunpack.c.h.b16 %v26
  %v137 = vunpack.c.l.b16 %v27
  %v138 = vunpack.c.h.b16 %v27
  %v139 = vunpack.c.l.b16 %v28
  %v140 = vunpack.c.h.b16 %v28
  %v141 = vunpack.c.l.b16 %v29
  %v142 = vunpack.c.h.b16 %v29
  %v143 = vunpack.c.l.b16 %v30
  %v144 = vunpack.c.h.b16 %v30
  %v145 = vunpack.c.l.b16 %v31
  %v146 = vunpack.c.h.b16 %v31
  %v147 = vunpack.c.l.b16 %v32
  %v148 = vunpack.c.h.b16 %v32
  %v149 = vunpack.c.l.b16 %v33
  %v150 = vunpack.c.h.b16 %v33
  %v151 = vunpack.c.l.b16 %v34
  %v152 = vunpack.c.h.b16 %v34
  %v153 = vunpack.c.l.b16 %v35
  %v154 = vunpack.c.h.b16 %v35
  %v155 = vunpack.c.l.b16 %v36
  %v156 = vunpack.c.h.b16 %v36
  %v157 = vunpack.c.l.b16 %v37
  %v158 = vunpack.c.h.b16 %v37
  %v159 = vunpack.c.l.b16 %v38
  %v160 = vunpack.c.h.b16 %v38
  %v161 = vunpack.c.l.b16 %v39
  %v162 = vunpack.c.h.b16 %v39
  %v163 = vunpack.c.l.b16 %v40
  %v164 = vunpack.c.h.b16 %v40
  %v165 = vunpack.c.l.b16 %v41
  %v166 = vunpack.c.h.b16 %v41
  %v167 = vunpack.c.l.b16 %v42
  %v168 = vunpack.c.h.b16 %v42
  %v169 = vunpack.c.l.b16 %v43
  %v170 = vunpack.c.h.b16 %v43
  %v171 = vunpack.c.l.b16 %v44
  %v172 = vunpack.c.h.b16 %v44
  %v173 = vunpack.c.l.b16 %v45
  %v174 = vunpack.c.h.b16 %v45
  %v175 = vunpack.c.l.b16 %v46
  %v176 = vunpack.c.h.b16 %v46
  %v177 = vunpack.c.l.b16 %v47
  %v178 = vunpack.c.h.b16 %v47
  %v179 = vunpack.c.l.b16 %v48
  %v180 = vunpack.c.h.b16 %v48
  %v181 = vunpack.c.l.b16 %v49
  %v182 = vunpack.c.h.b16 %v49
  %v183 = vunpack.c.l.b16 %v50
  %v184 = vunpack.c.h.b16 %v50
  %v185 = vunpack.c.l.b16 %v51
  %v186 = vunpack.c.h.b16 %v51
  %v187 = vunpack.c.l.b16 %v52
  %v188 = vunpack.c.h.b16 %v52
  %v189 = vunpack.c.l.b16 %v53
  %v190 = vunpack.c.h.b16 %v53
  %v191 = vunpack.c.l.b16 %v54
  %v192 = vunpack.c.h.b16 %v54
  %v193 = vunpack.c.l.b16 %v55
  %v194 = vunpack.c.h.b16 %v55
  %v195 = vunpack.c.l.b16 %v56
  %v196 = vunpack.c.h.b16 %v56
  %v197 = vunpack.c.l.b16 %v57
  %v198 = vunpack.c.h.b16 %v57
  %v199 = vunpack.c.l.b16 %v58
  %v200 = vunpack.c.h.b16 %v58
  %v201 = vunpack.c.l.b16 %v59
  %v202 = vunpack.c.h.b16 %v59
  %v203 = vunpack.c.l.b16 %v60
  %v204 = vunpack.c.h.b16 %v60
  %v205 = vpack.c.b16 %v125, %v109
  %v206 = vpack.c.b16 %v126, %v110
  %v207 = vpack.c.b16 %v127, %v111
  %v208 = vpack.c.b16 %v128, %v112
  %v209 = vpack.c.b16 %v129, %v113
  %v210 = vpack.c.b16 %v130, %v114
  %v211 = vpack.c.b16 %v131, %v115
  %v212 = vpack.c.b16 %v132, %v116
  %v213 = vpack.c.b16 %v133, %v117
  %v214 = vpack.c.b16 %v134, %v118
  %v215 = vpack.c.b16 %v135, %v119
  %v216 = vpack.c.b16 %v136, %v120
  %v217 = vpack.c.b16 %v137, %v121
  %v218 = vpack.c.b16 %v138, %v122
  %v219 = vpack.c.b16 %v139, %v123
  %v220 = vpack.c.b16 %v140, %v124
  %v221 = vpack.c.b16 %v157, %v141
  %v222 = vpack.c.b16 %v158, %v142
  %v223 = vpack.c.b16 %v159, %v143
  %v224 = vpack.c.b16 %v160, %v144
  %v225 = vpack.c.b16 %v161, %v145
  %v226 = vpack.c.b16 %v162, %v146
  %v227 = vpack.c.b16 %v163, %v147
  %v228 = vpack.c.b16 %v164, %v148
  %v229 = vpack.c.b16 %v165, %v149
  %v230 = vpack.c.b16 %v166, %v150
  %v231 = vpack.c.b16 %v167, %v151
  %v232 = vpack.c.b16 %v168, %v152
  %v233 = vpack.c.b16 %v169, %v153
  %v234 = vpack.c.b16 %v170, %v154
  %v235 = vpack.c.b16 %v171, %v155
  %v236 = vpack.c.b16 %v172, %v156
  %v237 = vpack.c.b16 %v189, %v173
  %v238 = vpack.c.b16 %v190, %v174
  %v239 = vpack.c.b16 %v191, %v175
  %v240 = vpack.c.b16 %v192, %v176
  %v241 = vpack.c.b16 %v193, %v177
  %v242 = vpack.c.b16 %v194, %v178
  %v243 = vpack.c.b16 %v195, %v179
  %v244 = vpack.c.b16 %v196, %v180
  %v245 = vpack.c.b16 %v197, %v181
  %v246 = vpack.c.b16 %v198, %v182
  %v247 = vpack.c.b16 %v199, %v183
  %v248 = vpack.c.b16 %v200, %v184
  %v249 = vpack.c.b16 %v201, %v185
  %v250 = vpack.c.b16 %v202, %v186
  %v251 = vpack.c.b16 %v203, %v187
  %v252 = vpack.c.b16 %v204, %v188
  %vm301 = vcmask 392192
  %v303 = vsel %vm301, %v12, 0
  %305 = vmatprep.subr.bf16.mxu0 0
  %306 = vmatpush1.bf16.msra.mxu0 0
  %307 = vmatprep.subr.bf16.mxu0 0
  %308 = vmatpush1.bf16.msra.mxu0 0
  %309 = vmatprep.subr.bf16.mxu0 0
  %310 = vmatpush1.bf16.msra.mxu0 0
  %311 = vmatprep.subr.bf16.mxu0 0
  %312 = vmatpush1.bf16.msra.mxu0 0
  %313 = vmatprep.subr.bf16.mxu0 0
  %314 = vmatpush1.bf16.msra.mxu0 0
  %315 = vmatprep.subr.bf16.mxu0 %v238
  %316 = vmatpush1.bf16.msra.mxu0 %v237
  %317 = vmatprep.subr.bf16.mxu0 %v222
  %318 = vmatpush1.bf16.msra.mxu0 %v221
  %319 = vmatprep.subr.bf16.mxu0 %v206
  %320 = vmatpush1.bf16.msra.mxu0 %v205
  %321 = vmatprep.subr.bf16.mxu0 0
  %322 = vmatpush2.bf16.msra.mxu0 0
  %323 = vmatprep.subr.bf16.mxu0 0
  %324 = vmatpush2.bf16.msra.mxu0 0
  %325 = vmatprep.subr.bf16.mxu0 0
  %326 = vmatpush2.bf16.msra.mxu0 0
  %327 = vmatprep.subr.bf16.mxu0 0
  %328 = vmatpush2.bf16.msra.mxu0 0
  %329 = vmatprep.subr.bf16.mxu0 0
  %330 = vmatpush2.bf16.msra.mxu0 0
  %331 = vmatprep.subr.bf16.mxu0 0
  %332 = vmatpush2.bf16.msra.mxu0 0
  %333 = vmatprep.subr.bf16.mxu0 0
  %334 = vmatpush2.bf16.msra.mxu0 0
  %335 = vmatprep.subr.bf16.mxu0 0
  %336 = vmatpush2.bf16.msra.mxu0 0
  %337 = vmatprep.mubr.bf16.mxu0 0
  %338 = vmatmul.mubr.bf16.gmra.mxu0 %v303
  %v339 = vpop.f32.mrf.mxu0
  %v340 = vadd.f32 0.0, %v339
  %v341 = vpop.f32.mrf.mxu0
  %v342 = vadd.f32 0.0, %v341
  %v343 = vpop.f32.mrf.mxu0
  %v344 = vpop.f32.mrf.mxu0
  %345 = vdwg.mxu0
  %346 = vmatprep.subr.bf16.mxu0 0
  %347 = vmatpush1.bf16.msra.mxu0 0
  %348 = vmatprep.subr.bf16.mxu0 0
  %349 = vmatpush1.bf16.msra.mxu0 0
  %350 = vmatprep.subr.bf16.mxu0 0
  %351 = vmatpush1.bf16.msra.mxu0 0
  %352 = vmatprep.subr.bf16.mxu0 0
  %353 = vmatpush1.bf16.msra.mxu0 0
  %354 = vmatprep.subr.bf16.mxu0 0
  %355 = vmatpush1.bf16.msra.mxu0 0
  %356 = vmatprep.subr.bf16.mxu0 %v240
  %357 = vmatpush1.bf16.msra.mxu0 %v239
  %358 = vmatprep.subr.bf16.mxu0 %v224
  %359 = vmatpush1.bf16.msra.mxu0 %v223
  %360 = vmatprep.subr.bf16.mxu0 %v208
  %361 = vmatpush1.bf16.msra.mxu0 %v207
  %362 = vmatprep.subr.bf16.mxu0 0
  %363 = vmatpush2.bf16.msra.mxu0 0
  %364 = vmatprep.subr.bf16.mxu0 0
  %365 = vmatpush2.bf16.msra.mxu0 0
  %366 = vmatprep.subr.bf16.mxu0 0
  %367 = vmatpush2.bf16.msra.mxu0 0
  %368 = vmatprep.subr.bf16.mxu0 0
  %369 = vmatpush2.bf16.msra.mxu0 0
  %370 = vmatprep.subr.bf16.mxu0 0
  %371 = vmatpush2.bf16.msra.mxu0 0
  %372 = vmatprep.subr.bf16.mxu0 0
  %373 = vmatpush2.bf16.msra.mxu0 0
  %374 = vmatprep.subr.bf16.mxu0 0
  %375 = vmatpush2.bf16.msra.mxu0 0
  %376 = vmatprep.subr.bf16.mxu0 0
  %377 = vmatpush2.bf16.msra.mxu0 0
  %378 = vmatprep.mubr.bf16.mxu0 0
  %379 = vmatmul.mubr.bf16.gmra.mxu0 %v303
  %v380 = vpop.f32.mrf.mxu0
  %v381 = vadd.f32 0.0, %v380
  %v382 = vpop.f32.mrf.mxu0
  %v383 = vadd.f32 0.0, %v382
  %v384 = vpop.f32.mrf.mxu0
  %v385 = vpop.f32.mrf.mxu0
  %386 = vdwg.mxu0
  %387 = vmatprep.subr.bf16.mxu0 0
  %388 = vmatpush1.bf16.msra.mxu0 0
  %389 = vmatprep.subr.bf16.mxu0 0
  %390 = vmatpush1.bf16.msra.mxu0 0
  %391 = vmatprep.subr.bf16.mxu0 0
  %392 = vmatpush1.bf16.msra.mxu0 0
  %393 = vmatprep.subr.bf16.mxu0 0
  %394 = vmatpush1.bf16.msra.mxu0 0
  %395 = vmatprep.subr.bf16.mxu0 0
  %396 = vmatpush1.bf16.msra.mxu0 0
  %397 = vmatprep.subr.bf16.mxu0 %v242
  %398 = vmatpush1.bf16.msra.mxu0 %v241
  %399 = vmatprep.subr.bf16.mxu0 %v226
  %400 = vmatpush1.bf16.msra.mxu0 %v225
  %401 = vmatprep.subr.bf16.mxu0 %v210
  %402 = vmatpush1.bf16.msra.mxu0 %v209
  %403 = vmatprep.subr.bf16.mxu0 0
  %404 = vmatpush2.bf16.msra.mxu0 0
  %405 = vmatprep.subr.bf16.mxu0 0
  %406 = vmatpush2.bf16.msra.mxu0 0
  %407 = vmatprep.subr.bf16.mxu0 0
  %408 = vmatpush2.bf16.msra.mxu0 0
  %409 = vmatprep.subr.bf16.mxu0 0
  %410 = vmatpush2.bf16.msra.mxu0 0
  %411 = vmatprep.subr.bf16.mxu0 0
  %412 = vmatpush2.bf16.msra.mxu0 0
  %413 = vmatprep.subr.bf16.mxu0 0
  %414 = vmatpush2.bf16.msra.mxu0 0
  %415 = vmatprep.subr.bf16.mxu0 0
  %416 = vmatpush2.bf16.msra.mxu0 0
  %417 = vmatprep.subr.bf16.mxu0 0
  %418 = vmatpush2.bf16.msra.mxu0 0
  %419 = vmatprep.mubr.bf16.mxu0 0
  %420 = vmatmul.mubr.bf16.gmra.mxu0 %v303
  %v421 = vpop.f32.mrf.mxu0
  %v422 = vadd.f32 0.0, %v421
  %v423 = vpop.f32.mrf.mxu0
  %v424 = vadd.f32 0.0, %v423
  %v425 = vpop.f32.mrf.mxu0
  %v426 = vpop.f32.mrf.mxu0
  %427 = vdwg.mxu0
  %428 = vmatprep.subr.bf16.mxu0 0
  %429 = vmatpush1.bf16.msra.mxu0 0
  %430 = vmatprep.subr.bf16.mxu0 0
  %431 = vmatpush1.bf16.msra.mxu0 0
  %432 = vmatprep.subr.bf16.mxu0 0
  %433 = vmatpush1.bf16.msra.mxu0 0
  %434 = vmatprep.subr.bf16.mxu0 0
  %435 = vmatpush1.bf16.msra.mxu0 0
  %436 = vmatprep.subr.bf16.mxu0 0
  %437 = vmatpush1.bf16.msra.mxu0 0
  %438 = vmatprep.subr.bf16.mxu0 %v244
  %439 = vmatpush1.bf16.msra.mxu0 %v243
  %440 = vmatprep.subr.bf16.mxu0 %v228
  %441 = vmatpush1.bf16.msra.mxu0 %v227
  %442 = vmatprep.subr.bf16.mxu0 %v212
  %443 = vmatpush1.bf16.msra.mxu0 %v211
  %444 = vmatprep.subr.bf16.mxu0 0
  %445 = vmatpush2.bf16.msra.mxu0 0
  %446 = vmatprep.subr.bf16.mxu0 0
  %447 = vmatpush2.bf16.msra.mxu0 0
  %448 = vmatprep.subr.bf16.mxu0 0
  %449 = vmatpush2.bf16.msra.mxu0 0
  %450 = vmatprep.subr.bf16.mxu0 0
  %451 = vmatpush2.bf16.msra.mxu0 0
  %452 = vmatprep.subr.bf16.mxu0 0
  %453 = vmatpush2.bf16.msra.mxu0 0
  %454 = vmatprep.subr.bf16.mxu0 0
  %455 = vmatpush2.bf16.msra.mxu0 0
  %456 = vmatprep.subr.bf16.mxu0 0
  %457 = vmatpush2.bf16.msra.mxu0 0
  %458 = vmatprep.subr.bf16.mxu0 0
  %459 = vmatpush2.bf16.msra.mxu0 0
  %460 = vmatprep.mubr.bf16.mxu0 0
  %461 = vmatmul.mubr.bf16.gmra.mxu0 %v303
  %v462 = vpop.f32.mrf.mxu0
  %v463 = vadd.f32 0.0, %v462
  %v464 = vpop.f32.mrf.mxu0
  %v465 = vadd.f32 0.0, %v464
  %v466 = vpop.f32.mrf.mxu0
  %v467 = vpop.f32.mrf.mxu0
  %468 = vdwg.mxu0
  %469 = vmatprep.subr.bf16.mxu0 0
  %470 = vmatpush1.bf16.msra.mxu0 0
  %471 = vmatprep.subr.bf16.mxu0 0
  %472 = vmatpush1.bf16.msra.mxu0 0
  %473 = vmatprep.subr.bf16.mxu0 0
  %474 = vmatpush1.bf16.msra.mxu0 0
  %475 = vmatprep.subr.bf16.mxu0 0
  %476 = vmatpush1.bf16.msra.mxu0 0
  %477 = vmatprep.subr.bf16.mxu0 0
  %478 = vmatpush1.bf16.msra.mxu0 0
  %479 = vmatprep.subr.bf16.mxu0 %v246
  %480 = vmatpush1.bf16.msra.mxu0 %v245
  %481 = vmatprep.subr.bf16.mxu0 %v230
  %482 = vmatpush1.bf16.msra.mxu0 %v229
  %483 = vmatprep.subr.bf16.mxu0 %v214
  %484 = vmatpush1.bf16.msra.mxu0 %v213
  %485 = vmatprep.subr.bf16.mxu0 0
  %486 = vmatpush2.bf16.msra.mxu0 0
  %487 = vmatprep.subr.bf16.mxu0 0
  %488 = vmatpush2.bf16.msra.mxu0 0
  %489 = vmatprep.subr.bf16.mxu0 0
  %490 = vmatpush2.bf16.msra.mxu0 0
  %491 = vmatprep.subr.bf16.mxu0 0
  %492 = vmatpush2.bf16.msra.mxu0 0
  %493 = vmatprep.subr.bf16.mxu0 0
  %494 = vmatpush2.bf16.msra.mxu0 0
  %495 = vmatprep.subr.bf16.mxu0 0
  %496 = vmatpush2.bf16.msra.mxu0 0
  %497 = vmatprep.subr.bf16.mxu0 0
  %498 = vmatpush2.bf16.msra.mxu0 0
  %499 = vmatprep.subr.bf16.mxu0 0
  %500 = vmatpush2.bf16.msra.mxu0 0
  %501 = vmatprep.mubr.bf16.mxu0 0
  %502 = vmatmul.mubr.bf16.gmra.mxu0 %v303
  %v503 = vpop.f32.mrf.mxu0
  %v504 = vadd.f32 0.0, %v503
  %v505 = vpop.f32.mrf.mxu0
  %v506 = vadd.f32 0.0, %v505
  %v507 = vpop.f32.mrf.mxu0
  %v508 = vpop.f32.mrf.mxu0
  %509 = vdwg.mxu0
  %510 = vmatprep.subr.bf16.mxu0 0
  %511 = vmatpush1.bf16.msra.mxu0 0
  %512 = vmatprep.subr.bf16.mxu0 0
  %513 = vmatpush1.bf16.msra.mxu0 0
  %514 = vmatprep.subr.bf16.mxu0 0
  %515 = vmatpush1.bf16.msra.mxu0 0
  %516 = vmatprep.subr.bf16.mxu0 0
  %517 = vmatpush1.bf16.msra.mxu0 0
  %518 = vmatprep.subr.bf16.mxu0 0
  %519 = vmatpush1.bf16.msra.mxu0 0
  %520 = vmatprep.subr.bf16.mxu0 %v248
  %521 = vmatpush1.bf16.msra.mxu0 %v247
  %522 = vmatprep.subr.bf16.mxu0 %v232
  %523 = vmatpush1.bf16.msra.mxu0 %v231
  %524 = vmatprep.subr.bf16.mxu0 %v216
  %525 = vmatpush1.bf16.msra.mxu0 %v215
  %526 = vmatprep.subr.bf16.mxu0 0
  %527 = vmatpush2.bf16.msra.mxu0 0
  %528 = vmatprep.subr.bf16.mxu0 0
  %529 = vmatpush2.bf16.msra.mxu0 0
  %530 = vmatprep.subr.bf16.mxu0 0
  %531 = vmatpush2.bf16.msra.mxu0 0
  %532 = vmatprep.subr.bf16.mxu0 0
  %533 = vmatpush2.bf16.msra.mxu0 0
  %534 = vmatprep.subr.bf16.mxu0 0
  %535 = vmatpush2.bf16.msra.mxu0 0
  %536 = vmatprep.subr.bf16.mxu0 0
  %537 = vmatpush2.bf16.msra.mxu0 0
  %538 = vmatprep.subr.bf16.mxu0 0
  %539 = vmatpush2.bf16.msra.mxu0 0
  %540 = vmatprep.subr.bf16.mxu0 0
  %541 = vmatpush2.bf16.msra.mxu0 0
  %542 = vmatprep.mubr.bf16.mxu0 0
  %543 = vmatmul.mubr.bf16.gmra.mxu0 %v303
  %v544 = vpop.f32.mrf.mxu0
  %v545 = vadd.f32 0.0, %v544
  %v546 = vpop.f32.mrf.mxu0
  %v547 = vadd.f32 0.0, %v546
  %v548 = vpop.f32.mrf.mxu0
  %v549 = vpop.f32.mrf.mxu0
  %550 = vdwg.mxu0
  %551 = vmatprep.subr.bf16.mxu0 0
  %552 = vmatpush1.bf16.msra.mxu0 0
  %553 = vmatprep.subr.bf16.mxu0 0
  %554 = vmatpush1.bf16.msra.mxu0 0
  %555 = vmatprep.subr.bf16.mxu0 0
  %556 = vmatpush1.bf16.msra.mxu0 0
  %557 = vmatprep.subr.bf16.mxu0 0
  %558 = vmatpush1.bf16.msra.mxu0 0
  %559 = vmatprep.subr.bf16.mxu0 0
  %560 = vmatpush1.bf16.msra.mxu0 0
  %561 = vmatprep.subr.bf16.mxu0 %v250
  %562 = vmatpush1.bf16.msra.mxu0 %v249
  %563 = vmatprep.subr.bf16.mxu0 %v234
  %564 = vmatpush1.bf16.msra.mxu0 %v233
  %565 = vmatprep.subr.bf16.mxu0 %v218
  %566 = vmatpush1.bf16.msra.mxu0 %v217
  %567 = vmatprep.subr.bf16.mxu0 0
  %568 = vmatpush2.bf16.msra.mxu0 0
  %569 = vmatprep.subr.bf16.mxu0 0
  %570 = vmatpush2.bf16.msra.mxu0 0
  %571 = vmatprep.subr.bf16.mxu0 0
  %572 = vmatpush2.bf16.msra.mxu0 0
  %573 = vmatprep.subr.bf16.mxu0 0
  %574 = vmatpush2.bf16.msra.mxu0 0
  %575 = vmatprep.subr.bf16.mxu0 0
  %576 = vmatpush2.bf16.msra.mxu0 0
  %577 = vmatprep.subr.bf16.mxu0 0
  %578 = vmatpush2.bf16.msra.mxu0 0
  %579 = vmatprep.subr.bf16.mxu0 0
  %580 = vmatpush2.bf16.msra.mxu0 0
  %581 = vmatprep.subr.bf16.mxu0 0
  %582 = vmatpush2.bf16.msra.mxu0 0
  %583 = vmatprep.mubr.bf16.mxu0 0
  %584 = vmatmul.mubr.bf16.gmra.mxu0 %v303
  %v585 = vpop.f32.mrf.mxu0
  %v586 = vadd.f32 0.0, %v585
  %v587 = vpop.f32.mrf.mxu0
  %v588 = vadd.f32 0.0, %v587
  %v589 = vpop.f32.mrf.mxu0
  %v590 = vpop.f32.mrf.mxu0
  %591 = vdwg.mxu0
  %592 = vmatprep.subr.bf16.mxu0 0
  %593 = vmatpush1.bf16.msra.mxu0 0
  %594 = vmatprep.subr.bf16.mxu0 0
  %595 = vmatpush1.bf16.msra.mxu0 0
  %596 = vmatprep.subr.bf16.mxu0 0
  %597 = vmatpush1.bf16.msra.mxu0 0
  %598 = vmatprep.subr.bf16.mxu0 0
  %599 = vmatpush1.bf16.msra.mxu0 0
  %600 = vmatprep.subr.bf16.mxu0 0
  %601 = vmatpush1.bf16.msra.mxu0 0
  %602 = vmatprep.subr.bf16.mxu0 %v252
  %603 = vmatpush1.bf16.msra.mxu0 %v251
  %604 = vmatprep.subr.bf16.mxu0 %v236
  %605 = vmatpush1.bf16.msra.mxu0 %v235
  %606 = vmatprep.subr.bf16.mxu0 %v220
  %607 = vmatpush1.bf16.msra.mxu0 %v219
  %608 = vmatprep.subr.bf16.mxu0 0
  %609 = vmatpush2.bf16.msra.mxu0 0
  %610 = vmatprep.subr.bf16.mxu0 0
  %611 = vmatpush2.bf16.msra.mxu0 0
  %612 = vmatprep.subr.bf16.mxu0 0
  %613 = vmatpush2.bf16.msra.mxu0 0
  %614 = vmatprep.subr.bf16.mxu0 0
  %615 = vmatpush2.bf16.msra.mxu0 0
  %616 = vmatprep.subr.bf16.mxu0 0
  %617 = vmatpush2.bf16.msra.mxu0 0
  %618 = vmatprep.subr.bf16.mxu0 0
  %619 = vmatpush2.bf16.msra.mxu0 0
  %620 = vmatprep.subr.bf16.mxu0 0
  %621 = vmatpush2.bf16.msra.mxu0 0
  %622 = vmatprep.subr.bf16.mxu0 0
  %623 = vmatpush2.bf16.msra.mxu0 0
  %624 = vmatprep.mubr.bf16.mxu0 0
  %625 = vmatmul.mubr.bf16.gmra.mxu0 %v303
  %v626 = vpop.f32.mrf.mxu0
  %v627 = vadd.f32 0.0, %v626
  %v628 = vpop.f32.mrf.mxu0
  %v629 = vadd.f32 0.0, %v628
  %v630 = vpop.f32.mrf.mxu0
  %v631 = vpop.f32.mrf.mxu0
  %632 = vdwg.mxu0
  %vm633 = vcmp.ge.f32.partialorder %v340, 0.0
  %vm634 = vcmp.ge.f32.partialorder %v342, 0.0
  %vm635 = vcmp.ge.f32.partialorder %v381, 0.0
  %vm636 = vcmp.ge.f32.partialorder %v383, 0.0
  %vm637 = vcmp.ge.f32.partialorder %v422, 0.0
  %vm638 = vcmp.ge.f32.partialorder %v424, 0.0
  %vm639 = vcmp.ge.f32.partialorder %v463, 0.0
  %vm640 = vcmp.ge.f32.partialorder %v465, 0.0
  %vm641 = vcmp.ge.f32.partialorder %v504, 0.0
  %vm642 = vcmp.ge.f32.partialorder %v506, 0.0
  %vm643 = vcmp.ge.f32.partialorder %v545, 0.0
  %vm644 = vcmp.ge.f32.partialorder %v547, 0.0
  %vm645 = vcmp.ge.f32.partialorder %v586, 0.0
  %vm646 = vcmp.ge.f32.partialorder %v588, 0.0
  %vm647 = vcmp.ge.f32.partialorder %v627, 0.0
  %vm648 = vcmp.ge.f32.partialorder %v629, 0.0
  %v649 = vmul.f32 %v340, 0.2
  %v650 = vmul.f32 %v342, 0.2
  %v651 = vmul.f32 %v381, 0.2
  %v652 = vmul.f32 %v383, 0.2
  %v653 = vmul.f32 %v422, 0.2
  %v654 = vmul.f32 %v424, 0.2
  %v655 = vmul.f32 %v463, 0.2
  %v656 = vmul.f32 %v465, 0.2
  %v657 = vmul.f32 %v504, 0.2
  %v658 = vmul.f32 %v506, 0.2
  %v659 = vmul.f32 %v545, 0.2
  %v660 = vmul.f32 %v547, 0.2
  %v661 = vmul.f32 %v586, 0.2
  %v662 = vmul.f32 %v588, 0.2
  %v663 = vmul.f32 %v627, 0.2
  %v664 = vmul.f32 %v629, 0.2
  %v665 = vsel %vm633, %v340, %v649
  %v666 = vsel %vm634, %v342, %v650
  %v667 = vsel %vm635, %v381, %v651
  %v668 = vsel %vm636, %v383, %v652
  %v669 = vsel %vm637, %v422, %v653
  %v670 = vsel %vm638, %v424, %v654
  %v671 = vsel %vm639, %v463, %v655
  %v672 = vsel %vm640, %v465, %v656
  %v673 = vsel %vm641, %v504, %v657
  %v674 = vsel %vm642, %v506, %v658
  %v675 = vsel %vm643, %v545, %v659
  %v676 = vsel %vm644, %v547, %v660
  %v677 = vsel %vm645, %v586, %v661
  %v678 = vsel %vm646, %v588, %v662
  %v679 = vsel %vm647, %v627, %v663
  %v680 = vsel %vm648, %v629, %v664
  %v681 = vpack.c.bf16 %v665, %v665
  %v682 = vpack.c.bf16 %v666, %v666
  %v683 = vpack.c.bf16 %v667, %v667
  %v684 = vpack.c.bf16 %v668, %v668
  %v685 = vpack.c.bf16 %v669, %v669
  %v686 = vpack.c.bf16 %v670, %v670
  %v687 = vpack.c.bf16 %v671, %v671
  %v688 = vpack.c.bf16 %v672, %v672
  %v689 = vpack.c.bf16 %v673, %v673
  %v690 = vpack.c.bf16 %v674, %v674
  %v691 = vpack.c.bf16 %v675, %v675
  %v692 = vpack.c.bf16 %v676, %v676
  %v693 = vpack.c.bf16 %v677, %v677
  %v694 = vpack.c.bf16 %v678, %v678
  %v695 = vpack.c.bf16 %v679, %v679
  %v696 = vpack.c.bf16 %v680, %v680
  %v713 = vunpack.c.l.b16 %v681
  %v714 = vunpack.c.l.b16 %v682
  %v715 = vunpack.c.l.b16 %v683
  %v716 = vunpack.c.l.b16 %v684
  %v717 = vunpack.c.l.b16 %v685
  %v718 = vunpack.c.l.b16 %v686
  %v719 = vunpack.c.l.b16 %v687
  %v720 = vunpack.c.l.b16 %v688
  %v721 = vunpack.c.l.b16 %v689
  %v722 = vunpack.c.l.b16 %v690
  %v723 = vunpack.c.l.b16 %v691
  %v724 = vunpack.c.l.b16 %v692
  %v725 = vunpack.c.l.b16 %v693
  %v726 = vunpack.c.l.b16 %v694
  %v727 = vunpack.c.l.b16 %v695
  %v728 = vunpack.c.l.b16 %v696
  %v729 = vpack.c.b16 %v714, %v713
  %v730 = vpack.c.b16 %v716, %v715
  %v731 = vpack.c.b16 %v718, %v717
  %v732 = vpack.c.b16 %v720, %v719
  %v733 = vpack.c.b16 %v722, %v721
  %v734 = vpack.c.b16 %v724, %v723
  %v735 = vpack.c.b16 %v726, %v725
  %v736 = vpack.c.b16 %v728, %v727
  %745 = vst [vmem:[%s2] sm:$0xff] %v729
  %746 = vst [vmem:[%s2 + $0x8] sm:$0xff] %v730
  %747 = vst [vmem:[%s2 + $0x10] sm:$0xff] %v731
  %748 = vst [vmem:[%s2 + $0x18] sm:$0xff] %v732
  %749 = vst [vmem:[%s2 + $0x20] sm:$0xff] %v733
  %750 = vst [vmem:[%s2 + $0x28] sm:$0xff] %v734
  %751 = vst [vmem:[%s2 + $0x30] sm:$0xff] %v735
  %752 = vst [vmem:[%s2 + $0x38] sm:$0xff] %v736
  // Predicated region
  $region10: #{discriminator_forward.5} parent=0 // pred_check
    _
  $region11: #{discriminator_forward.5} parent=0 // pred_check_branch
    %754 = sbr.rel (0) target = $region13
  $region12: #{discriminator_forward.5} parent=0 // pred_region
    _
  $region13: #{discriminator_forward.5} parent=0 // pred_fallthru
    _
  // Predicated region
  $region14: #{discriminator_forward.5} parent=0 // pred_check
    _
  $region15: #{discriminator_forward.5} parent=0 // pred_check_branch
    %756 = sbr.rel (0) target = $region17
  $region16: #{discriminator_forward.5} parent=0 // pred_region
    _
  $region17: #{discriminator_forward.5} parent=0 // pred_fallthru
    _

// kernel: discriminator_forward.6
$region0: #{discriminator_forward.6}
  #allocation0 [shape = 'u32[]', space=smem, size = 0x4, offset = 0x4, fixed_abs, tag = 'smem constant byte address 0x4 - core index']
  #allocation1 [shape = 'u32[144,128]{1,0:T(1,128)}', space=vmem, size = 0x12000, scoped, tag = 'internal scratch']
  %s0 = inlined_call_operand.vmem [shape: bf16[16,128], index: 0, kind: input, shape index: {}]
  %s1 = inlined_call_operand.vmem [shape: bf16[128,512], index: 1, kind: input, shape index: {}]
  %s2 = inlined_call_operand.vmem [shape: f32[16,1], index: 2, kind: input, shape index: {}]
  %s3 = inlined_call_operand.vmem [shape: f32[16,1], index: 3, kind: input, shape index: {}]
  %s4 = inlined_call_operand.vmem [shape: bf16[16,512], index: 4, kind: output, shape index: {}]
  %s5 = sld [smem:[#allocation0]]
  $region26: #{discriminator_forward.6} parent=0
    _
  %s7 = ssub.s32 1, %s5
  %s8 = scalar_select 0, %s7, %s5
  // Predicated region
  $region2: #{discriminator_forward.6} parent=0 // pred_check
    _
  $region3: #{discriminator_forward.6} parent=0 // pred_check_branch
    %10 = sbr.rel (0) target = $region5
  $region4: #{discriminator_forward.6} parent=0 // pred_region
    _
  $region5: #{discriminator_forward.6} parent=0 // pred_fallthru
    _
  // Predicated region
  $region6: #{discriminator_forward.6} parent=0 // pred_check
    _
  $region7: #{discriminator_forward.6} parent=0 // pred_check_branch
    %12 = sbr.rel (0) target = $region9
  $region8: #{discriminator_forward.6} parent=0 // pred_region
    _
  $region9: #{discriminator_forward.6} parent=0 // pred_fallthru
    _
  // Predicated region
  $region10: #{discriminator_forward.6} parent=0 // pred_check
    _
  $region11: #{discriminator_forward.6} parent=0 // pred_check_branch
    %14 = sbr.rel (0) target = $region13
  $region12: #{discriminator_forward.6} parent=0 // pred_region
    _
  $region13: #{discriminator_forward.6} parent=0 // pred_fallthru
    _
  // Predicated region
  $region14: #{discriminator_forward.6} parent=0 // pred_check
    _
  $region15: #{discriminator_forward.6} parent=0 // pred_check_branch
    %16 = sbr.rel (0) target = $region17
  $region16: #{discriminator_forward.6} parent=0 // pred_region
    _
  $region17: #{discriminator_forward.6} parent=0 // pred_fallthru
    _
  %v18 = vld [vmem:[%s0] sm:$0xf]
  %v19 = vld [vmem:[%s0 + $0x4] sm:$0xf]
  %v20 = vld [vmem:[%s1] sm:$0xff]
  %v21 = vld [vmem:[%s1 + $0x8] sm:$0xff]
  %v22 = vld [vmem:[%s1 + $0x10] sm:$0xff]
  %v23 = vld [vmem:[%s1 + $0x18] sm:$0xff]
  %v24 = vld [vmem:[%s1 + $0x20] sm:$0xff]
  %v25 = vld [vmem:[%s1 + $0x28] sm:$0xff]
  %v26 = vld [vmem:[%s1 + $0x30] sm:$0xff]
  %v27 = vld [vmem:[%s1 + $0x38] sm:$0xff]
  %v28 = vld [vmem:[%s1 + $0x40] sm:$0xff]
  %v29 = vld [vmem:[%s1 + $0x48] sm:$0xff]
  %v30 = vld [vmem:[%s1 + $0x50] sm:$0xff]
  %v31 = vld [vmem:[%s1 + $0x58] sm:$0xff]
  %v32 = vld [vmem:[%s1 + $0x60] sm:$0xff]
  %v33 = vld [vmem:[%s1 + $0x68] sm:$0xff]
  %v34 = vld [vmem:[%s1 + $0x70] sm:$0xff]
  %v35 = vld [vmem:[%s1 + $0x78] sm:$0xff]
  %v36 = vld [vmem:[%s1 + $0x80] sm:$0xff]
  %v37 = vld [vmem:[%s1 + $0x88] sm:$0xff]
  %v38 = vld [vmem:[%s1 + $0x90] sm:$0xff]
  %v39 = vld [vmem:[%s1 + $0x98] sm:$0xff]
  %v40 = vld [vmem:[%s1 + $0xa0] sm:$0xff]
  %v41 = vld [vmem:[%s1 + $0xa8] sm:$0xff]
  %v42 = vld [vmem:[%s1 + $0xb0] sm:$0xff]
  %v43 = vld [vmem:[%s1 + $0xb8] sm:$0xff]
  %v44 = vld [vmem:[%s1 + $0xc0] sm:$0xff]
  %v45 = vld [vmem:[%s1 + $0xc8] sm:$0xff]
  %v46 = vld [vmem:[%s1 + $0xd0] sm:$0xff]
  %v47 = vld [vmem:[%s1 + $0xd8] sm:$0xff]
  %v48 = vld [vmem:[%s1 + $0xe0] sm:$0xff]
  %v49 = vld [vmem:[%s1 + $0xe8] sm:$0xff]
  %v50 = vld [vmem:[%s1 + $0xf0] sm:$0xff]
  %v51 = vld [vmem:[%s1 + $0xf8] sm:$0xff]
  %v54 = vunpack.c.l.b16 %v18
  %v55 = vunpack.c.l.b16 %v19
  %v56 = vpack.c.b16 %v55, %v54
  %v90 = vunpack.c.l.b16 %v20
  %v91 = vunpack.c.h.b16 %v20
  %v92 = vunpack.c.l.b16 %v21
  %v93 = vunpack.c.h.b16 %v21
  %v94 = vunpack.c.l.b16 %v22
  %v95 = vunpack.c.h.b16 %v22
  %v96 = vunpack.c.l.b16 %v23
  %v97 = vunpack.c.h.b16 %v23
  %v98 = vunpack.c.l.b16 %v24
  %v99 = vunpack.c.h.b16 %v24
  %v100 = vunpack.c.l.b16 %v25
  %v101 = vunpack.c.h.b16 %v25
  %v102 = vunpack.c.l.b16 %v26
  %v103 = vunpack.c.h.b16 %v26
  %v104 = vunpack.c.l.b16 %v27
  %v105 = vunpack.c.h.b16 %v27
  %v106 = vunpack.c.l.b16 %v28
  %v107 = vunpack.c.h.b16 %v28
  %v108 = vunpack.c.l.b16 %v29
  %v109 = vunpack.c.h.b16 %v29
  %v110 = vunpack.c.l.b16 %v30
  %v111 = vunpack.c.h.b16 %v30
  %v112 = vunpack.c.l.b16 %v31
  %v113 = vunpack.c.h.b16 %v31
  %v114 = vunpack.c.l.b16 %v32
  %v115 = vunpack.c.h.b16 %v32
  %v116 = vunpack.c.l.b16 %v33
  %v117 = vunpack.c.h.b16 %v33
  %v118 = vunpack.c.l.b16 %v34
  %v119 = vunpack.c.h.b16 %v34
  %v120 = vunpack.c.l.b16 %v35
  %v121 = vunpack.c.h.b16 %v35
  %v122 = vunpack.c.l.b16 %v36
  %v123 = vunpack.c.h.b16 %v36
  %v124 = vunpack.c.l.b16 %v37
  %v125 = vunpack.c.h.b16 %v37
  %v126 = vunpack.c.l.b16 %v38
  %v127 = vunpack.c.h.b16 %v38
  %v128 = vunpack.c.l.b16 %v39
  %v129 = vunpack.c.h.b16 %v39
  %v130 = vunpack.c.l.b16 %v40
  %v131 = vunpack.c.h.b16 %v40
  %v132 = vunpack.c.l.b16 %v41
  %v133 = vunpack.c.h.b16 %v41
  %v134 = vunpack.c.l.b16 %v42
  %v135 = vunpack.c.h.b16 %v42
  %v136 = vunpack.c.l.b16 %v43
  %v137 = vunpack.c.h.b16 %v43
  %v138 = vunpack.c.l.b16 %v44
  %v139 = vunpack.c.h.b16 %v44
  %v140 = vunpack.c.l.b16 %v45
  %v141 = vunpack.c.h.b16 %v45
  %v142 = vunpack.c.l.b16 %v46
  %v143 = vunpack.c.h.b16 %v46
  %v144 = vunpack.c.l.b16 %v47
  %v145 = vunpack.c.h.b16 %v47
  %v146 = vunpack.c.l.b16 %v48
  %v147 = vunpack.c.h.b16 %v48
  %v148 = vunpack.c.l.b16 %v49
  %v149 = vunpack.c.h.b16 %v49
  %v150 = vunpack.c.l.b16 %v50
  %v151 = vunpack.c.h.b16 %v50
  %v152 = vunpack.c.l.b16 %v51
  %v153 = vunpack.c.h.b16 %v51
  %v154 = vpack.c.b16 %v94, %v90
  %v155 = vpack.c.b16 %v95, %v91
  %v156 = vpack.c.b16 %v96, %v92
  %v157 = vpack.c.b16 %v97, %v93
  %v158 = vpack.c.b16 %v102, %v98
  %v159 = vpack.c.b16 %v103, %v99
  %v160 = vpack.c.b16 %v104, %v100
  %v161 = vpack.c.b16 %v105, %v101
  %v162 = vpack.c.b16 %v110, %v106
  %v163 = vpack.c.b16 %v111, %v107
  %v164 = vpack.c.b16 %v112, %v108
  %v165 = vpack.c.b16 %v113, %v109
  %v166 = vpack.c.b16 %v118, %v114
  %v167 = vpack.c.b16 %v119, %v115
  %v168 = vpack.c.b16 %v120, %v116
  %v169 = vpack.c.b16 %v121, %v117
  %v170 = vpack.c.b16 %v126, %v122
  %v171 = vpack.c.b16 %v127, %v123
  %v172 = vpack.c.b16 %v128, %v124
  %v173 = vpack.c.b16 %v129, %v125
  %v174 = vpack.c.b16 %v134, %v130
  %v175 = vpack.c.b16 %v135, %v131
  %v176 = vpack.c.b16 %v136, %v132
  %v177 = vpack.c.b16 %v137, %v133
  %v178 = vpack.c.b16 %v142, %v138
  %v179 = vpack.c.b16 %v143, %v139
  %v180 = vpack.c.b16 %v144, %v140
  %v181 = vpack.c.b16 %v145, %v141
  %v182 = vpack.c.b16 %v150, %v146
  %v183 = vpack.c.b16 %v151, %v147
  %v184 = vpack.c.b16 %v152, %v148
  %v185 = vpack.c.b16 %v153, %v149
  %218 = vmatprep.subr.bf16.mxu0 %v183
  %219 = vmatpush1.bf16.msra.mxu0 %v182
  %220 = vmatprep.subr.bf16.mxu0 %v179
  %221 = vmatpush1.bf16.msra.mxu0 %v178
  %222 = vmatprep.subr.bf16.mxu0 %v175
  %223 = vmatpush1.bf16.msra.mxu0 %v174
  %224 = vmatprep.subr.bf16.mxu0 %v171
  %225 = vmatpush1.bf16.msra.mxu0 %v170
  %226 = vmatprep.subr.bf16.mxu0 %v167
  %227 = vmatpush1.bf16.msra.mxu0 %v166
  %228 = vmatprep.subr.bf16.mxu0 %v163
  %229 = vmatpush1.bf16.msra.mxu0 %v162
  %230 = vmatprep.subr.bf16.mxu0 %v159
  %231 = vmatpush1.bf16.msra.mxu0 %v158
  %232 = vmatprep.subr.bf16.mxu0 %v155
  %233 = vmatpush1.bf16.msra.mxu0 %v154
  %234 = vmatprep.subr.bf16.mxu0 0
  %235 = vmatpush2.bf16.msra.mxu0 0
  %236 = vmatprep.subr.bf16.mxu0 0
  %237 = vmatpush2.bf16.msra.mxu0 0
  %238 = vmatprep.subr.bf16.mxu0 0
  %239 = vmatpush2.bf16.msra.mxu0 0
  %240 = vmatprep.subr.bf16.mxu0 0
  %241 = vmatpush2.bf16.msra.mxu0 0
  %242 = vmatprep.subr.bf16.mxu0 0
  %243 = vmatpush2.bf16.msra.mxu0 0
  %244 = vmatprep.subr.bf16.mxu0 0
  %245 = vmatpush2.bf16.msra.mxu0 0
  %246 = vmatprep.subr.bf16.mxu0 0
  %247 = vmatpush2.bf16.msra.mxu0 0
  %248 = vmatprep.subr.bf16.mxu0 0
  %249 = vmatpush2.bf16.msra.mxu0 0
  %250 = vmatprep.mubr.bf16.mxu0 0
  %251 = vmatmul.mubr.bf16.gmra.mxu0 %v56
  %v252 = vpop.f32.mrf.mxu0
  %v253 = vadd.f32 0.0, %v252
  %v254 = vpop.f32.mrf.mxu0
  %v255 = vadd.f32 0.0, %v254
  %v256 = vpop.f32.mrf.mxu0
  %v257 = vadd.f32 0.0, %v256
  %v258 = vpop.f32.mrf.mxu0
  %v259 = vadd.f32 0.0, %v258
  %260 = vdwg.mxu0
  %261 = vmatprep.subr.bf16.mxu0 %v185
  %262 = vmatpush1.bf16.msra.mxu0 %v184
  %263 = vmatprep.subr.bf16.mxu0 %v181
  %264 = vmatpush1.bf16.msra.mxu0 %v180
  %265 = vmatprep.subr.bf16.mxu0 %v177
  %266 = vmatpush1.bf16.msra.mxu0 %v176
  %267 = vmatprep.subr.bf16.mxu0 %v173
  %268 = vmatpush1.bf16.msra.mxu0 %v172
  %269 = vmatprep.subr.bf16.mxu0 %v169
  %270 = vmatpush1.bf16.msra.mxu0 %v168
  %271 = vmatprep.subr.bf16.mxu0 %v165
  %272 = vmatpush1.bf16.msra.mxu0 %v164
  %273 = vmatprep.subr.bf16.mxu0 %v161
  %274 = vmatpush1.bf16.msra.mxu0 %v160
  %275 = vmatprep.subr.bf16.mxu0 %v157
  %276 = vmatpush1.bf16.msra.mxu0 %v156
  %277 = vmatprep.subr.bf16.mxu0 0
  %278 = vmatpush2.bf16.msra.mxu0 0
  %279 = vmatprep.subr.bf16.mxu0 0
  %280 = vmatpush2.bf16.msra.mxu0 0
  %281 = vmatprep.subr.bf16.mxu0 0
  %282 = vmatpush2.bf16.msra.mxu0 0
  %283 = vmatprep.subr.bf16.mxu0 0
  %284 = vmatpush2.bf16.msra.mxu0 0
  %285 = vmatprep.subr.bf16.mxu0 0
  %286 = vmatpush2.bf16.msra.mxu0 0
  %287 = vmatprep.subr.bf16.mxu0 0
  %288 = vmatpush2.bf16.msra.mxu0 0
  %289 = vmatprep.subr.bf16.mxu0 0
  %290 = vmatpush2.bf16.msra.mxu0 0
  %291 = vmatprep.subr.bf16.mxu0 0
  %292 = vmatpush2.bf16.msra.mxu0 0
  %293 = vmatprep.mubr.bf16.mxu0 0
  %294 = vmatmul.mubr.bf16.gmra.mxu0 %v56
  %v295 = vpop.f32.mrf.mxu0
  %v296 = vadd.f32 0.0, %v295
  %v297 = vpop.f32.mrf.mxu0
  %v298 = vadd.f32 0.0, %v297
  %v299 = vpop.f32.mrf.mxu0
  %v300 = vadd.f32 0.0, %v299
  %v301 = vpop.f32.mrf.mxu0
  %v302 = vadd.f32 0.0, %v301
  %303 = vdwg.mxu0
  %v304 = vadd.f32 %v253, %v255
  %v305 = vadd.f32 %v304, %v296
  %v306 = vadd.f32 %v305, %v298
  %307 = vadd.xlane.f32.xlu0 %v306
  %v308 = vpop.xlane.xlu0 %307
  %v309 = vadd.f32 %v257, %v259
  %v310 = vadd.f32 %v309, %v300
  %v311 = vadd.f32 %v310, %v302
  %312 = vadd.xlane.f32.xlu0 %v311
  %v313 = vpop.xlane.xlu0 %312
  %v314 = vmul.f32 %v308, 0.001953125
  %v315 = vmul.f32 %v313, 0.001953125
  %v316 = vsub.f32 %v253, %v314
  %v317 = vsub.f32 %v255, %v314
  %v318 = vsub.f32 %v296, %v314
  %v319 = vsub.f32 %v298, %v314
  %v320 = vsub.f32 %v257, %v315
  %v321 = vsub.f32 %v259, %v315
  %v322 = vsub.f32 %v300, %v315
  %v323 = vsub.f32 %v302, %v315
  %v324 = vmul.f32 %v316, %v316
  %v325 = vmul.f32 %v317, %v317
  %v326 = vmul.f32 %v318, %v318
  %v327 = vmul.f32 %v319, %v319
  %v328 = vmul.f32 %v320, %v320
  %v329 = vmul.f32 %v321, %v321
  %v330 = vmul.f32 %v322, %v322
  %v331 = vmul.f32 %v323, %v323
  %v332 = vadd.f32 %v324, %v325
  %v333 = vadd.f32 %v332, %v326
  %v334 = vadd.f32 %v333, %v327
  %335 = vadd.xlane.f32.xlu0 %v334
  %v336 = vpop.xlane.xlu0 %335
  %v337 = vadd.f32 %v328, %v329
  %v338 = vadd.f32 %v337, %v330
  %v339 = vadd.f32 %v338, %v331
  %340 = vadd.xlane.f32.xlu0 %v339
  %v341 = vpop.xlane.xlu0 %340
  %v342 = vmul.f32 %v336, 0.001953125
  %v343 = vmul.f32 %v341, 0.001953125
  %v344 = vadd.f32 %v342, 1e-05
  %v345 = vadd.f32 %v343, 1e-05
  %v346 = vrsqrt.pop %v344
  %v347 = vrsqrt.pop %v345
  %v348 = vmul.f32 %v316, %v346
  %v349 = vmul.f32 %v317, %v346
  %v350 = vmul.f32 %v318, %v346
  %v351 = vmul.f32 %v319, %v346
  %v352 = vmul.f32 %v320, %v347
  %v353 = vmul.f32 %v321, %v347
  %v354 = vmul.f32 %v322, %v347
  %v355 = vmul.f32 %v323, %v347
  %v356 = vld [vmem:[%s2] sm:$0xff]
  %v357 = vld [vmem:[%s2 + $0x8] sm:$0xff]
  %359 = vset.pattern.permute.xlu0 0
  %360 = vperm.xlu0 %359, %v356
  %v361 = vpop.permute.xlu0 %360
  %364 = vset.pattern.permute.xlu0 0
  %365 = vperm.xlu0 %364, %v357
  %v366 = vpop.permute.xlu0 %365
  %v368 = vmul.f32 %v348, %v361
  %v369 = vmul.f32 %v349, %v361
  %v370 = vmul.f32 %v350, %v361
  %v371 = vmul.f32 %v351, %v361
  %v372 = vmul.f32 %v352, %v366
  %v373 = vmul.f32 %v353, %v366
  %v374 = vmul.f32 %v354, %v366
  %v375 = vmul.f32 %v355, %v366
  %v376 = vld [vmem:[%s3] sm:$0xff]
  %v377 = vld [vmem:[%s3 + $0x8] sm:$0xff]
  %379 = vset.pattern.permute.xlu0 0
  %380 = vperm.xlu0 %379, %v376
  %v381 = vpop.permute.xlu0 %380
  %384 = vset.pattern.permute.xlu0 0
  %385 = vperm.xlu0 %384, %v377
  %v386 = vpop.permute.xlu0 %385
  %v388 = vadd.f32 %v368, %v381
  %v389 = vadd.f32 %v369, %v381
  %v390 = vadd.f32 %v370, %v381
  %v391 = vadd.f32 %v371, %v381
  %v392 = vadd.f32 %v372, %v386
  %v393 = vadd.f32 %v373, %v386
  %v394 = vadd.f32 %v374, %v386
  %v395 = vadd.f32 %v375, %v386
  %vm396 = vcmp.ge.f32.partialorder %v388, 0.0
  %vm397 = vcmp.ge.f32.partialorder %v389, 0.0
  %vm398 = vcmp.ge.f32.partialorder %v390, 0.0
  %vm399 = vcmp.ge.f32.partialorder %v391, 0.0
  %vm400 = vcmp.ge.f32.partialorder %v392, 0.0
  %vm401 = vcmp.ge.f32.partialorder %v393, 0.0
  %vm402 = vcmp.ge.f32.partialorder %v394, 0.0
  %vm403 = vcmp.ge.f32.partialorder %v395, 0.0
  %v404 = vmul.f32 %v388, 0.2
  %v405 = vmul.f32 %v389, 0.2
  %v406 = vmul.f32 %v390, 0.2
  %v407 = vmul.f32 %v391, 0.2
  %v408 = vmul.f32 %v392, 0.2
  %v409 = vmul.f32 %v393, 0.2
  %v410 = vmul.f32 %v394, 0.2
  %v411 = vmul.f32 %v395, 0.2
  %v412 = vsel %vm396, %v388, %v404
  %v413 = vsel %vm397, %v389, %v405
  %v414 = vsel %vm398, %v390, %v406
  %v415 = vsel %vm399, %v391, %v407
  %v416 = vsel %vm400, %v392, %v408
  %v417 = vsel %vm401, %v393, %v409
  %v418 = vsel %vm402, %v394, %v410
  %v419 = vsel %vm403, %v395, %v411
  %v420 = vpack.c.bf16 %v416, %v412
  %v421 = vpack.c.bf16 %v417, %v413
  %v422 = vpack.c.bf16 %v418, %v414
  %v423 = vpack.c.bf16 %v419, %v415
  %v428 = vunpack.c.l.b16 %v420
  %v429 = vunpack.c.l.b16 %v421
  %v430 = vunpack.c.l.b16 %v422
  %v431 = vunpack.c.l.b16 %v423
  %v432 = vunpack.c.h.b16 %v420
  %v433 = vunpack.c.h.b16 %v421
  %v434 = vunpack.c.h.b16 %v422
  %v435 = vunpack.c.h.b16 %v423
  %v436 = vpack.c.b16 %v429, %v428
  %v437 = vpack.c.b16 %v431, %v430
  %v438 = vpack.c.b16 %v433, %v432
  %v439 = vpack.c.b16 %v435, %v434
  %444 = vst [vmem:[%s4] sm:$0xff] %v436
  %445 = vst [vmem:[%s4 + $0x8] sm:$0xff] %v437
  %446 = vst [vmem:[%s4 + $0x10] sm:$0xff] %v438
  %447 = vst [vmem:[%s4 + $0x18] sm:$0xff] %v439
  // Predicated region
  $region18: #{discriminator_forward.6} parent=0 // pred_check
    _
  $region19: #{discriminator_forward.6} parent=0 // pred_check_branch
    %449 = sbr.rel (0) target = $region21
  $region20: #{discriminator_forward.6} parent=0 // pred_region
    _
  $region21: #{discriminator_forward.6} parent=0 // pred_fallthru
    _
  // Predicated region
  $region22: #{discriminator_forward.6} parent=0 // pred_check
    _
  $region23: #{discriminator_forward.6} parent=0 // pred_check_branch
    %451 = sbr.rel (0) target = $region25
  $region24: #{discriminator_forward.6} parent=0 // pred_region
    _
  $region25: #{discriminator_forward.6} parent=0 // pred_fallthru
    _

// kernel: discriminator_forward.7
$region0: #{discriminator_forward.7}
  #allocation0 [shape = 'u32[]', space=smem, size = 0x4, offset = 0x4, fixed_abs, tag = 'smem constant byte address 0x4 - core index']
  #allocation1 [shape = 'u32[144,128]{1,0:T(1,128)}', space=vmem, size = 0x12000, scoped, tag = 'internal scratch']
  %s0 = inlined_call_operand.vmem [shape: bf16[32,256], index: 0, kind: input, shape index: {}]
  %s1 = inlined_call_operand.vmem [shape: bf16[256,128], index: 1, kind: input, shape index: {}]
  %s2 = inlined_call_operand.vmem [shape: f32[32,1], index: 2, kind: input, shape index: {}]
  %s3 = inlined_call_operand.vmem [shape: f32[32,1], index: 3, kind: input, shape index: {}]
  %s4 = inlined_call_operand.vmem [shape: bf16[32,128], index: 4, kind: output, shape index: {}]
  %s5 = sld [smem:[#allocation0]]
  $region26: #{discriminator_forward.7} parent=0
    _
  %s7 = ssub.s32 1, %s5
  %s8 = scalar_select 0, %s7, %s5
  // Predicated region
  $region2: #{discriminator_forward.7} parent=0 // pred_check
    _
  $region3: #{discriminator_forward.7} parent=0 // pred_check_branch
    %10 = sbr.rel (0) target = $region5
  $region4: #{discriminator_forward.7} parent=0 // pred_region
    _
  $region5: #{discriminator_forward.7} parent=0 // pred_fallthru
    _
  // Predicated region
  $region6: #{discriminator_forward.7} parent=0 // pred_check
    _
  $region7: #{discriminator_forward.7} parent=0 // pred_check_branch
    %12 = sbr.rel (0) target = $region9
  $region8: #{discriminator_forward.7} parent=0 // pred_region
    _
  $region9: #{discriminator_forward.7} parent=0 // pred_fallthru
    _
  // Predicated region
  $region10: #{discriminator_forward.7} parent=0 // pred_check
    _
  $region11: #{discriminator_forward.7} parent=0 // pred_check_branch
    %14 = sbr.rel (0) target = $region13
  $region12: #{discriminator_forward.7} parent=0 // pred_region
    _
  $region13: #{discriminator_forward.7} parent=0 // pred_fallthru
    _
  // Predicated region
  $region14: #{discriminator_forward.7} parent=0 // pred_check
    _
  $region15: #{discriminator_forward.7} parent=0 // pred_check_branch
    %16 = sbr.rel (0) target = $region17
  $region16: #{discriminator_forward.7} parent=0 // pred_region
    _
  $region17: #{discriminator_forward.7} parent=0 // pred_fallthru
    _
  %v18 = vld [vmem:[%s0] sm:$0xff]
  %v19 = vld [vmem:[%s0 + $0x8] sm:$0xff]
  %v20 = vld [vmem:[%s0 + $0x10] sm:$0xff]
  %v21 = vld [vmem:[%s0 + $0x18] sm:$0xff]
  %v22 = vld [vmem:[%s1] sm:$0xf]
  %v23 = vld [vmem:[%s1 + $0x4] sm:$0xf]
  %v24 = vld [vmem:[%s1 + $0x8] sm:$0xf]
  %v25 = vld [vmem:[%s1 + $0xc] sm:$0xf]
  %v26 = vld [vmem:[%s1 + $0x10] sm:$0xf]
  %v27 = vld [vmem:[%s1 + $0x14] sm:$0xf]
  %v28 = vld [vmem:[%s1 + $0x18] sm:$0xf]
  %v29 = vld [vmem:[%s1 + $0x1c] sm:$0xf]
  %v30 = vld [vmem:[%s1 + $0x20] sm:$0xf]
  %v31 = vld [vmem:[%s1 + $0x24] sm:$0xf]
  %v32 = vld [vmem:[%s1 + $0x28] sm:$0xf]
  %v33 = vld [vmem:[%s1 + $0x2c] sm:$0xf]
  %v34 = vld [vmem:[%s1 + $0x30] sm:$0xf]
  %v35 = vld [vmem:[%s1 + $0x34] sm:$0xf]
  %v36 = vld [vmem:[%s1 + $0x38] sm:$0xf]
  %v37 = vld [vmem:[%s1 + $0x3c] sm:$0xf]
  %v38 = vld [vmem:[%s1 + $0x40] sm:$0xf]
  %v39 = vld [vmem:[%s1 + $0x44] sm:$0xf]
  %v40 = vld [vmem:[%s1 + $0x48] sm:$0xf]
  %v41 = vld [vmem:[%s1 + $0x4c] sm:$0xf]
  %v42 = vld [vmem:[%s1 + $0x50] sm:$0xf]
  %v43 = vld [vmem:[%s1 + $0x54] sm:$0xf]
  %v44 = vld [vmem:[%s1 + $0x58] sm:$0xf]
  %v45 = vld [vmem:[%s1 + $0x5c] sm:$0xf]
  %v46 = vld [vmem:[%s1 + $0x60] sm:$0xf]
  %v47 = vld [vmem:[%s1 + $0x64] sm:$0xf]
  %v48 = vld [vmem:[%s1 + $0x68] sm:$0xf]
  %v49 = vld [vmem:[%s1 + $0x6c] sm:$0xf]
  %v50 = vld [vmem:[%s1 + $0x70] sm:$0xf]
  %v51 = vld [vmem:[%s1 + $0x74] sm:$0xf]
  %v52 = vld [vmem:[%s1 + $0x78] sm:$0xf]
  %v53 = vld [vmem:[%s1 + $0x7c] sm:$0xf]
  %v58 = vunpack.c.l.b16 %v18
  %v59 = vunpack.c.h.b16 %v18
  %v60 = vunpack.c.l.b16 %v19
  %v61 = vunpack.c.h.b16 %v19
  %v62 = vunpack.c.l.b16 %v20
  %v63 = vunpack.c.h.b16 %v20
  %v64 = vunpack.c.l.b16 %v21
  %v65 = vunpack.c.h.b16 %v21
  %v66 = vpack.c.b16 %v60, %v58
  %v67 = vpack.c.b16 %v61, %v59
  %v68 = vpack.c.b16 %v64, %v62
  %v69 = vpack.c.b16 %v65, %v63
  %v106 = vunpack.c.l.b16 %v22
  %v107 = vunpack.c.l.b16 %v23
  %v108 = vunpack.c.l.b16 %v24
  %v109 = vunpack.c.l.b16 %v25
  %v110 = vunpack.c.l.b16 %v26
  %v111 = vunpack.c.l.b16 %v27
  %v112 = vunpack.c.l.b16 %v28
  %v113 = vunpack.c.l.b16 %v29
  %v114 = vunpack.c.l.b16 %v30
  %v115 = vunpack.c.l.b16 %v31
  %v116 = vunpack.c.l.b16 %v32
  %v117 = vunpack.c.l.b16 %v33
  %v118 = vunpack.c.l.b16 %v34
  %v119 = vunpack.c.l.b16 %v35
  %v120 = vunpack.c.l.b16 %v36
  %v121 = vunpack.c.l.b16 %v37
  %v122 = vunpack.c.l.b16 %v38
  %v123 = vunpack.c.l.b16 %v39
  %v124 = vunpack.c.l.b16 %v40
  %v125 = vunpack.c.l.b16 %v41
  %v126 = vunpack.c.l.b16 %v42
  %v127 = vunpack.c.l.b16 %v43
  %v128 = vunpack.c.l.b16 %v44
  %v129 = vunpack.c.l.b16 %v45
  %v130 = vunpack.c.l.b16 %v46
  %v131 = vunpack.c.l.b16 %v47
  %v132 = vunpack.c.l.b16 %v48
  %v133 = vunpack.c.l.b16 %v49
  %v134 = vunpack.c.l.b16 %v50
  %v135 = vunpack.c.l.b16 %v51
  %v136 = vunpack.c.l.b16 %v52
  %v137 = vunpack.c.l.b16 %v53
  %v138 = vpack.c.b16 %v107, %v106
  %v139 = vpack.c.b16 %v109, %v108
  %v140 = vpack.c.b16 %v111, %v110
  %v141 = vpack.c.b16 %v113, %v112
  %v142 = vpack.c.b16 %v115, %v114
  %v143 = vpack.c.b16 %v117, %v116
  %v144 = vpack.c.b16 %v119, %v118
  %v145 = vpack.c.b16 %v121, %v120
  %v146 = vpack.c.b16 %v123, %v122
  %v147 = vpack.c.b16 %v125, %v124
  %v148 = vpack.c.b16 %v127, %v126
  %v149 = vpack.c.b16 %v129, %v128
  %v150 = vpack.c.b16 %v131, %v130
  %v151 = vpack.c.b16 %v133, %v132
  %v152 = vpack.c.b16 %v135, %v134
  %v153 = vpack.c.b16 %v137, %v136
  %170 = vmatprep.subr.bf16.mxu0 0
  %171 = vmatpush1.bf16.msra.mxu0 %v145
  %172 = vmatprep.subr.bf16.mxu0 0
  %173 = vmatpush1.bf16.msra.mxu0 %v144
  %174 = vmatprep.subr.bf16.mxu0 0
  %175 = vmatpush1.bf16.msra.mxu0 %v143
  %176 = vmatprep.subr.bf16.mxu0 0
  %177 = vmatpush1.bf16.msra.mxu0 %v142
  %178 = vmatprep.subr.bf16.mxu0 0
  %179 = vmatpush1.bf16.msra.mxu0 %v141
  %180 = vmatprep.subr.bf16.mxu0 0
  %181 = vmatpush1.bf16.msra.mxu0 %v140
  %182 = vmatprep.subr.bf16.mxu0 0
  %183 = vmatpush1.bf16.msra.mxu0 %v139
  %184 = vmatprep.subr.bf16.mxu0 0
  %185 = vmatpush1.bf16.msra.mxu0 %v138
  %186 = vmatprep.subr.bf16.mxu0 0
  %187 = vmatpush2.bf16.msra.mxu0 %v153
  %188 = vmatprep.subr.bf16.mxu0 0
  %189 = vmatpush2.bf16.msra.mxu0 %v152
  %190 = vmatprep.subr.bf16.mxu0 0
  %191 = vmatpush2.bf16.msra.mxu0 %v151
  %192 = vmatprep.subr.bf16.mxu0 0
  %193 = vmatpush2.bf16.msra.mxu0 %v150
  %194 = vmatprep.subr.bf16.mxu0 0
  %195 = vmatpush2.bf16.msra.mxu0 %v149
  %196 = vmatprep.subr.bf16.mxu0 0
  %197 = vmatpush2.bf16.msra.mxu0 %v148
  %198 = vmatprep.subr.bf16.mxu0 0
  %199 = vmatpush2.bf16.msra.mxu0 %v147
  %200 = vmatprep.subr.bf16.mxu0 0
  %201 = vmatpush2.bf16.msra.mxu0 %v146
  %202 = vmatprep.mubr.bf16.mxu0 %v67
  %203 = vmatmul.mubr.bf16.gmra.mxu0 %v66
  %v204 = vpop.f32.mrf.mxu0
  %v205 = vadd.f32 0.0, %v204
  %v206 = vpop.f32.mrf.mxu0
  %v207 = vpop.f32.mrf.mxu0
  %v208 = vadd.f32 0.0, %v207
  %v209 = vpop.f32.mrf.mxu0
  %210 = vmatprep.mubr.bf16.mxu0 %v69
  %211 = vmatmul.mubr.bf16.gmra.mxu0 %v68
  %v212 = vpop.f32.mrf.mxu0
  %v213 = vadd.f32 0.0, %v212
  %v214 = vpop.f32.mrf.mxu0
  %v215 = vpop.f32.mrf.mxu0
  %v216 = vadd.f32 0.0, %v215
  %v217 = vpop.f32.mrf.mxu0
  %218 = vdwg.mxu0
  %219 = vadd.xlane.f32.xlu0 %v205
  %v220 = vpop.xlane.xlu0 %219
  %221 = vadd.xlane.f32.xlu0 %v208
  %v222 = vpop.xlane.xlu0 %221
  %223 = vadd.xlane.f32.xlu0 %v213
  %v224 = vpop.xlane.xlu0 %223
  %225 = vadd.xlane.f32.xlu0 %v216
  %v226 = vpop.xlane.xlu0 %225
  %v227 = vmul.f32 %v220, 0.0078125
  %v228 = vmul.f32 %v222, 0.0078125
  %v229 = vmul.f32 %v224, 0.0078125
  %v230 = vmul.f32 %v226, 0.0078125
  %v231 = vsub.f32 %v205, %v227
  %v232 = vsub.f32 %v208, %v228
  %v233 = vsub.f32 %v213, %v229
  %v234 = vsub.f32 %v216, %v230
  %v235 = vmul.f32 %v231, %v231
  %v236 = vmul.f32 %v232, %v232
  %v237 = vmul.f32 %v233, %v233
  %v238 = vmul.f32 %v234, %v234
  %239 = vadd.xlane.f32.xlu0 %v235
  %v240 = vpop.xlane.xlu0 %239
  %241 = vadd.xlane.f32.xlu0 %v236
  %v242 = vpop.xlane.xlu0 %241
  %243 = vadd.xlane.f32.xlu0 %v237
  %v244 = vpop.xlane.xlu0 %243
  %245 = vadd.xlane.f32.xlu0 %v238
  %v246 = vpop.xlane.xlu0 %245
  %v247 = vmul.f32 %v240, 0.0078125
  %v248 = vmul.f32 %v242, 0.0078125
  %v249 = vmul.f32 %v244, 0.0078125
  %v250 = vmul.f32 %v246, 0.0078125
  %v251 = vadd.f32 %v247, 1e-05
  %v252 = vadd.f32 %v248, 1e-05
  %v253 = vadd.f32 %v249, 1e-05
  %v254 = vadd.f32 %v250, 1e-05
  %v255 = vrsqrt.pop %v251
  %v256 = vrsqrt.pop %v252
  %v257 = vrsqrt.pop %v253
  %v258 = vrsqrt.pop %v254
  %v259 = vmul.f32 %v231, %v255
  %v260 = vmul.f32 %v232, %v256
  %v261 = vmul.f32 %v233, %v257
  %v262 = vmul.f32 %v234, %v258
  %v263 = vld [vmem:[%s2] sm:$0xff]
  %v264 = vld [vmem:[%s2 + $0x8] sm:$0xff]
  %v265 = vld [vmem:[%s2 + $0x10] sm:$0xff]
  %v266 = vld [vmem:[%s2 + $0x18] sm:$0xff]
  %268 = vset.pattern.permute.xlu0 0
  %269 = vperm.xlu0 %268, %v263
  %v270 = vpop.permute.xlu0 %269
  %273 = vset.pattern.permute.xlu0 0
  %274 = vperm.xlu0 %273, %v264
  %v275 = vpop.permute.xlu0 %274
  %278 = vset.pattern.permute.xlu0 0
  %279 = vperm.xlu0 %278, %v265
  %v280 = vpop.permute.xlu0 %279
  %283 = vset.pattern.permute.xlu0 0
  %284 = vperm.xlu0 %283, %v266
  %v285 = vpop.permute.xlu0 %284
  %v287 = vmul.f32 %v259, %v270
  %v288 = vmul.f32 %v260, %v275
  %v289 = vmul.f32 %v261, %v280
  %v290 = vmul.f32 %v262, %v285
  %v291 = vld [vmem:[%s3] sm:$0xff]
  %v292 = vld [vmem:[%s3 + $0x8] sm:$0xff]
  %v293 = vld [vmem:[%s3 + $0x10] sm:$0xff]
  %v294 = vld [vmem:[%s3 + $0x18] sm:$0xff]
  %296 = vset.pattern.permute.xlu0 0
  %297 = vperm.xlu0 %296, %v291
  %v298 = vpop.permute.xlu0 %297
  %301 = vset.pattern.permute.xlu0 0
  %302 = vperm.xlu0 %301, %v292
  %v303 = vpop.permute.xlu0 %302
  %306 = vset.pattern.permute.xlu0 0
  %307 = vperm.xlu0 %306, %v293
  %v308 = vpop.permute.xlu0 %307
  %311 = vset.pattern.permute.xlu0 0
  %312 = vperm.xlu0 %311, %v294
  %v313 = vpop.permute.xlu0 %312
  %v315 = vadd.f32 %v287, %v298
  %v316 = vadd.f32 %v288, %v303
  %v317 = vadd.f32 %v289, %v308
  %v318 = vadd.f32 %v290, %v313
  %vm319 = vcmp.ge.f32.partialorder %v315, 0.0
  %vm320 = vcmp.ge.f32.partialorder %v316, 0.0
  %vm321 = vcmp.ge.f32.partialorder %v317, 0.0
  %vm322 = vcmp.ge.f32.partialorder %v318, 0.0
  %v323 = vmul.f32 %v315, 0.2
  %v324 = vmul.f32 %v316, 0.2
  %v325 = vmul.f32 %v317, 0.2
  %v326 = vmul.f32 %v318, 0.2
  %v327 = vsel %vm319, %v315, %v323
  %v328 = vsel %vm320, %v316, %v324
  %v329 = vsel %vm321, %v317, %v325
  %v330 = vsel %vm322, %v318, %v326
  %v331 = vpack.c.bf16 %v328, %v327
  %v332 = vpack.c.bf16 %v330, %v329
  %v335 = vunpack.c.l.b16 %v331
  %v336 = vunpack.c.h.b16 %v331
  %v337 = vunpack.c.l.b16 %v332
  %v338 = vunpack.c.h.b16 %v332
  %v339 = vpack.c.b16 %v335, %v335
  %v340 = vpack.c.b16 %v336, %v336
  %v341 = vpack.c.b16 %v337, %v337
  %v342 = vpack.c.b16 %v338, %v338
  %347 = vst [vmem:[%s4] sm:$0xf] %v339
  %348 = vst [vmem:[%s4 + $0x4] sm:$0xf] %v340
  %349 = vst [vmem:[%s4 + $0x8] sm:$0xf] %v341
  %350 = vst [vmem:[%s4 + $0xc] sm:$0xf] %v342
  // Predicated region
  $region18: #{discriminator_forward.7} parent=0 // pred_check
    _
  $region19: #{discriminator_forward.7} parent=0 // pred_check_branch
    %352 = sbr.rel (0) target = $region21
  $region20: #{discriminator_forward.7} parent=0 // pred_region
    _
  $region21: #{discriminator_forward.7} parent=0 // pred_fallthru
    _
  // Predicated region
  $region22: #{discriminator_forward.7} parent=0 // pred_check
    _
  $region23: #{discriminator_forward.7} parent=0 // pred_check_branch
    %354 = sbr.rel (0) target = $region25
  $region24: #{discriminator_forward.7} parent=0 // pred_region
    _
  $region25: #{discriminator_forward.7} parent=0 // pred_fallthru
    _

// kernel: discriminator_forward.8
$region0: #{discriminator_forward.8}
  #allocation0 [shape = 'u32[]', space=smem, size = 0x4, offset = 0x4, fixed_abs, tag = 'smem constant byte address 0x4 - core index']
  #allocation1 [shape = 'u32[144,128]{1,0:T(1,128)}', space=vmem, size = 0x12000, scoped, tag = 'internal scratch']
  %s0 = inlined_call_operand.vmem [shape: bf16[64,512], index: 0, kind: input, shape index: {}]
  %s1 = inlined_call_operand.vmem [shape: bf16[512,32], index: 1, kind: input, shape index: {}]
  %s2 = inlined_call_operand.vmem [shape: f32[64,1], index: 2, kind: input, shape index: {}]
  %s3 = inlined_call_operand.vmem [shape: f32[64,1], index: 3, kind: input, shape index: {}]
  %s4 = inlined_call_operand.vmem [shape: bf16[64,32], index: 4, kind: output, shape index: {}]
  %s5 = sld [smem:[#allocation0]]
  $region26: #{discriminator_forward.8} parent=0
    _
  %s7 = ssub.s32 1, %s5
  %s8 = scalar_select 0, %s7, %s5
  // Predicated region
  $region2: #{discriminator_forward.8} parent=0 // pred_check
    _
  $region3: #{discriminator_forward.8} parent=0 // pred_check_branch
    %10 = sbr.rel (0) target = $region5
  $region4: #{discriminator_forward.8} parent=0 // pred_region
    _
  $region5: #{discriminator_forward.8} parent=0 // pred_fallthru
    _
  // Predicated region
  $region6: #{discriminator_forward.8} parent=0 // pred_check
    _
  $region7: #{discriminator_forward.8} parent=0 // pred_check_branch
    %12 = sbr.rel (0) target = $region9
  $region8: #{discriminator_forward.8} parent=0 // pred_region
    _
  $region9: #{discriminator_forward.8} parent=0 // pred_fallthru
    _
  // Predicated region
  $region10: #{discriminator_forward.8} parent=0 // pred_check
    _
  $region11: #{discriminator_forward.8} parent=0 // pred_check_branch
    %14 = sbr.rel (0) target = $region13
  $region12: #{discriminator_forward.8} parent=0 // pred_region
    _
  $region13: #{discriminator_forward.8} parent=0 // pred_fallthru
    _
  // Predicated region
  $region14: #{discriminator_forward.8} parent=0 // pred_check
    _
  $region15: #{discriminator_forward.8} parent=0 // pred_check_branch
    %16 = sbr.rel (0) target = $region17
  $region16: #{discriminator_forward.8} parent=0 // pred_region
    _
  $region17: #{discriminator_forward.8} parent=0 // pred_fallthru
    _
  %v18 = vld [vmem:[%s0] sm:$0xff]
  %v19 = vld [vmem:[%s0 + $0x8] sm:$0xff]
  %v20 = vld [vmem:[%s0 + $0x10] sm:$0xff]
  %v21 = vld [vmem:[%s0 + $0x18] sm:$0xff]
  %v22 = vld [vmem:[%s0 + $0x20] sm:$0xff]
  %v23 = vld [vmem:[%s0 + $0x28] sm:$0xff]
  %v24 = vld [vmem:[%s0 + $0x30] sm:$0xff]
  %v25 = vld [vmem:[%s0 + $0x38] sm:$0xff]
  %v26 = vld [vmem:[%s0 + $0x40] sm:$0xff]
  %v27 = vld [vmem:[%s0 + $0x48] sm:$0xff]
  %v28 = vld [vmem:[%s0 + $0x50] sm:$0xff]
  %v29 = vld [vmem:[%s0 + $0x58] sm:$0xff]
  %v30 = vld [vmem:[%s0 + $0x60] sm:$0xff]
  %v31 = vld [vmem:[%s0 + $0x68] sm:$0xff]
  %v32 = vld [vmem:[%s0 + $0x70] sm:$0xff]
  %v33 = vld [vmem:[%s0 + $0x78] sm:$0xff]
  %v34 = vld [vmem:[%s1] sm:$0xf]
  %v35 = vld [vmem:[%s1 + $0x4] sm:$0xf]
  %v36 = vld [vmem:[%s1 + $0x8] sm:$0xf]
  %v37 = vld [vmem:[%s1 + $0xc] sm:$0xf]
  %v38 = vld [vmem:[%s1 + $0x10] sm:$0xf]
  %v39 = vld [vmem:[%s1 + $0x14] sm:$0xf]
  %v40 = vld [vmem:[%s1 + $0x18] sm:$0xf]
  %v41 = vld [vmem:[%s1 + $0x1c] sm:$0xf]
  %v42 = vld [vmem:[%s1 + $0x20] sm:$0xf]
  %v43 = vld [vmem:[%s1 + $0x24] sm:$0xf]
  %v44 = vld [vmem:[%s1 + $0x28] sm:$0xf]
  %v45 = vld [vmem:[%s1 + $0x2c] sm:$0xf]
  %v46 = vld [vmem:[%s1 + $0x30] sm:$0xf]
  %v47 = vld [vmem:[%s1 + $0x34] sm:$0xf]
  %v48 = vld [vmem:[%s1 + $0x38] sm:$0xf]
  %v49 = vld [vmem:[%s1 + $0x3c] sm:$0xf]
  %v50 = vld [vmem:[%s1 + $0x40] sm:$0xf]
  %v51 = vld [vmem:[%s1 + $0x44] sm:$0xf]
  %v52 = vld [vmem:[%s1 + $0x48] sm:$0xf]
  %v53 = vld [vmem:[%s1 + $0x4c] sm:$0xf]
  %v54 = vld [vmem:[%s1 + $0x50] sm:$0xf]
  %v55 = vld [vmem:[%s1 + $0x54] sm:$0xf]
  %v56 = vld [vmem:[%s1 + $0x58] sm:$0xf]
  %v57 = vld [vmem:[%s1 + $0x5c] sm:$0xf]
  %v58 = vld [vmem:[%s1 + $0x60] sm:$0xf]
  %v59 = vld [vmem:[%s1 + $0x64] sm:$0xf]
  %v60 = vld [vmem:[%s1 + $0x68] sm:$0xf]
  %v61 = vld [vmem:[%s1 + $0x6c] sm:$0xf]
  %v62 = vld [vmem:[%s1 + $0x70] sm:$0xf]
  %v63 = vld [vmem:[%s1 + $0x74] sm:$0xf]
  %v64 = vld [vmem:[%s1 + $0x78] sm:$0xf]
  %v65 = vld [vmem:[%s1 + $0x7c] sm:$0xf]
  %v66 = vld [vmem:[%s1 + $0x80] sm:$0xf]
  %v67 = vld [vmem:[%s1 + $0x84] sm:$0xf]
  %v68 = vld [vmem:[%s1 + $0x88] sm:$0xf]
  %v69 = vld [vmem:[%s1 + $0x8c] sm:$0xf]
  %v70 = vld [vmem:[%s1 + $0x90] sm:$0xf]
  %v71 = vld [vmem:[%s1 + $0x94] sm:$0xf]
  %v72 = vld [vmem:[%s1 + $0x98] sm:$0xf]
  %v73 = vld [vmem:[%s1 + $0x9c] sm:$0xf]
  %v74 = vld [vmem:[%s1 + $0xa0] sm:$0xf]
  %v75 = vld [vmem:[%s1 + $0xa4] sm:$0xf]
  %v76 = vld [vmem:[%s1 + $0xa8] sm:$0xf]
  %v77 = vld [vmem:[%s1 + $0xac] sm:$0xf]
  %v78 = vld [vmem:[%s1 + $0xb0] sm:$0xf]
  %v79 = vld [vmem:[%s1 + $0xb4] sm:$0xf]
  %v80 = vld [vmem:[%s1 + $0xb8] sm:$0xf]
  %v81 = vld [vmem:[%s1 + $0xbc] sm:$0xf]
  %v82 = vld [vmem:[%s1 + $0xc0] sm:$0xf]
  %v83 = vld [vmem:[%s1 + $0xc4] sm:$0xf]
  %v84 = vld [vmem:[%s1 + $0xc8] sm:$0xf]
  %v85 = vld [vmem:[%s1 + $0xcc] sm:$0xf]
  %v86 = vld [vmem:[%s1 + $0xd0] sm:$0xf]
  %v87 = vld [vmem:[%s1 + $0xd4] sm:$0xf]
  %v88 = vld [vmem:[%s1 + $0xd8] sm:$0xf]
  %v89 = vld [vmem:[%s1 + $0xdc] sm:$0xf]
  %v90 = vld [vmem:[%s1 + $0xe0] sm:$0xf]
  %v91 = vld [vmem:[%s1 + $0xe4] sm:$0xf]
  %v92 = vld [vmem:[%s1 + $0xe8] sm:$0xf]
  %v93 = vld [vmem:[%s1 + $0xec] sm:$0xf]
  %v94 = vld [vmem:[%s1 + $0xf0] sm:$0xf]
  %v95 = vld [vmem:[%s1 + $0xf4] sm:$0xf]
  %v96 = vld [vmem:[%s1 + $0xf8] sm:$0xf]
  %v97 = vld [vmem:[%s1 + $0xfc] sm:$0xf]
  %v114 = vunpack.c.l.b16 %v18
  %v115 = vunpack.c.h.b16 %v18
  %v116 = vunpack.c.l.b16 %v19
  %v117 = vunpack.c.h.b16 %v19
  %v118 = vunpack.c.l.b16 %v20
  %v119 = vunpack.c.h.b16 %v20
  %v120 = vunpack.c.l.b16 %v21
  %v121 = vunpack.c.h.b16 %v21
  %v122 = vunpack.c.l.b16 %v22
  %v123 = vunpack.c.h.b16 %v22
  %v124 = vunpack.c.l.b16 %v23
  %v125 = vunpack.c.h.b16 %v23
  %v126 = vunpack.c.l.b16 %v24
  %v127 = vunpack.c.h.b16 %v24
  %v128 = vunpack.c.l.b16 %v25
  %v129 = vunpack.c.h.b16 %v25
  %v130 = vunpack.c.l.b16 %v26
  %v131 = vunpack.c.h.b16 %v26
  %v132 = vunpack.c.l.b16 %v27
  %v133 = vunpack.c.h.b16 %v27
  %v134 = vunpack.c.l.b16 %v28
  %v135 = vunpack.c.h.b16 %v28
  %v136 = vunpack.c.l.b16 %v29
  %v137 = vunpack.c.h.b16 %v29
  %v138 = vunpack.c.l.b16 %v30
  %v139 = vunpack.c.h.b16 %v30
  %v140 = vunpack.c.l.b16 %v31
  %v141 = vunpack.c.h.b16 %v31
  %v142 = vunpack.c.l.b16 %v32
  %v143 = vunpack.c.h.b16 %v32
  %v144 = vunpack.c.l.b16 %v33
  %v145 = vunpack.c.h.b16 %v33
  %v146 = vpack.c.b16 %v118, %v114
  %v147 = vpack.c.b16 %v119, %v115
  %v148 = vpack.c.b16 %v120, %v116
  %v149 = vpack.c.b16 %v121, %v117
  %v150 = vpack.c.b16 %v126, %v122
  %v151 = vpack.c.b16 %v127, %v123
  %v152 = vpack.c.b16 %v128, %v124
  %v153 = vpack.c.b16 %v129, %v125
  %v154 = vpack.c.b16 %v134, %v130
  %v155 = vpack.c.b16 %v135, %v131
  %v156 = vpack.c.b16 %v136, %v132
  %v157 = vpack.c.b16 %v137, %v133
  %v158 = vpack.c.b16 %v142, %v138
  %v159 = vpack.c.b16 %v143, %v139
  %v160 = vpack.c.b16 %v144, %v140
  %v161 = vpack.c.b16 %v145, %v141
  %v242 = vunpack.c.l.b16 %v34
  %v243 = vunpack.c.l.b16 %v35
  %v244 = vunpack.c.l.b16 %v36
  %v245 = vunpack.c.l.b16 %v37
  %v246 = vunpack.c.l.b16 %v38
  %v247 = vunpack.c.l.b16 %v39
  %v248 = vunpack.c.l.b16 %v40
  %v249 = vunpack.c.l.b16 %v41
  %v250 = vunpack.c.l.b16 %v42
  %v251 = vunpack.c.l.b16 %v43
  %v252 = vunpack.c.l.b16 %v44
  %v253 = vunpack.c.l.b16 %v45
  %v254 = vunpack.c.l.b16 %v46
  %v255 = vunpack.c.l.b16 %v47
  %v256 = vunpack.c.l.b16 %v48
  %v257 = vunpack.c.l.b16 %v49
  %v258 = vunpack.c.l.b16 %v50
  %v259 = vunpack.c.l.b16 %v51
  %v260 = vunpack.c.l.b16 %v52
  %v261 = vunpack.c.l.b16 %v53
  %v262 = vunpack.c.l.b16 %v54
  %v263 = vunpack.c.l.b16 %v55
  %v264 = vunpack.c.l.b16 %v56
  %v265 = vunpack.c.l.b16 %v57
  %v266 = vunpack.c.l.b16 %v58
  %v267 = vunpack.c.l.b16 %v59
  %v268 = vunpack.c.l.b16 %v60
  %v269 = vunpack.c.l.b16 %v61
  %v270 = vunpack.c.l.b16 %v62
  %v271 = vunpack.c.l.b16 %v63
  %v272 = vunpack.c.l.b16 %v64
  %v273 = vunpack.c.l.b16 %v65
  %v274 = vunpack.c.l.b16 %v66
  %v275 = vunpack.c.l.b16 %v67
  %v276 = vunpack.c.l.b16 %v68
  %v277 = vunpack.c.l.b16 %v69
  %v278 = vunpack.c.l.b16 %v70
  %v279 = vunpack.c.l.b16 %v71
  %v280 = vunpack.c.l.b16 %v72
  %v281 = vunpack.c.l.b16 %v73
  %v282 = vunpack.c.l.b16 %v74
  %v283 = vunpack.c.l.b16 %v75
  %v284 = vunpack.c.l.b16 %v76
  %v285 = vunpack.c.l.b16 %v77
  %v286 = vunpack.c.l.b16 %v78
  %v287 = vunpack.c.l.b16 %v79
  %v288 = vunpack.c.l.b16 %v80
  %v289 = vunpack.c.l.b16 %v81
  %v290 = vunpack.c.l.b16 %v82
  %v291 = vunpack.c.l.b16 %v83
  %v292 = vunpack.c.l.b16 %v84
  %v293 = vunpack.c.l.b16 %v85
  %v294 = vunpack.c.l.b16 %v86
  %v295 = vunpack.c.l.b16 %v87
  %v296 = vunpack.c.l.b16 %v88
  %v297 = vunpack.c.l.b16 %v89
  %v298 = vunpack.c.l.b16 %v90
  %v299 = vunpack.c.l.b16 %v91
  %v300 = vunpack.c.l.b16 %v92
  %v301 = vunpack.c.l.b16 %v93
  %v302 = vunpack.c.l.b16 %v94
  %v303 = vunpack.c.l.b16 %v95
  %v304 = vunpack.c.l.b16 %v96
  %v305 = vunpack.c.l.b16 %v97
  %v306 = vpack.c.b16 %v243, %v242
  %v307 = vpack.c.b16 %v245, %v244
  %v308 = vpack.c.b16 %v247, %v246
  %v309 = vpack.c.b16 %v249, %v248
  %v310 = vpack.c.b16 %v251, %v250
  %v311 = vpack.c.b16 %v253, %v252
  %v312 = vpack.c.b16 %v255, %v254
  %v313 = vpack.c.b16 %v257, %v256
  %v314 = vpack.c.b16 %v259, %v258
  %v315 = vpack.c.b16 %v261, %v260
  %v316 = vpack.c.b16 %v263, %v262
  %v317 = vpack.c.b16 %v265, %v264
  %v318 = vpack.c.b16 %v267, %v266
  %v319 = vpack.c.b16 %v269, %v268
  %v320 = vpack.c.b16 %v271, %v270
  %v321 = vpack.c.b16 %v273, %v272
  %v322 = vpack.c.b16 %v275, %v274
  %v323 = vpack.c.b16 %v277, %v276
  %v324 = vpack.c.b16 %v279, %v278
  %v325 = vpack.c.b16 %v281, %v280
  %v326 = vpack.c.b16 %v283, %v282
  %v327 = vpack.c.b16 %v285, %v284
  %v328 = vpack.c.b16 %v287, %v286
  %v329 = vpack.c.b16 %v289, %v288
  %v330 = vpack.c.b16 %v291, %v290
  %v331 = vpack.c.b16 %v293, %v292
  %v332 = vpack.c.b16 %v295, %v294
  %v333 = vpack.c.b16 %v297, %v296
  %v334 = vpack.c.b16 %v299, %v298
  %v335 = vpack.c.b16 %v301, %v300
  %v336 = vpack.c.b16 %v303, %v302
  %v337 = vpack.c.b16 %v305, %v304
  %370 = vmatprep.subr.bf16.mxu0 0
  %371 = vmatpush1.bf16.msra.mxu0 %v313
  %372 = vmatprep.subr.bf16.mxu0 0
  %373 = vmatpush1.bf16.msra.mxu0 %v312
  %374 = vmatprep.subr.bf16.mxu0 0
  %375 = vmatpush1.bf16.msra.mxu0 %v311
  %376 = vmatprep.subr.bf16.mxu0 0
  %377 = vmatpush1.bf16.msra.mxu0 %v310
  %378 = vmatprep.subr.bf16.mxu0 0
  %379 = vmatpush1.bf16.msra.mxu0 %v309
  %380 = vmatprep.subr.bf16.mxu0 0
  %381 = vmatpush1.bf16.msra.mxu0 %v308
  %382 = vmatprep.subr.bf16.mxu0 0
  %383 = vmatpush1.bf16.msra.mxu0 %v307
  %384 = vmatprep.subr.bf16.mxu0 0
  %385 = vmatpush1.bf16.msra.mxu0 %v306
  %386 = vmatprep.subr.bf16.mxu0 0
  %387 = vmatpush2.bf16.msra.mxu0 %v321
  %388 = vmatprep.subr.bf16.mxu0 0
  %389 = vmatpush2.bf16.msra.mxu0 %v320
  %390 = vmatprep.subr.bf16.mxu0 0
  %391 = vmatpush2.bf16.msra.mxu0 %v319
  %392 = vmatprep.subr.bf16.mxu0 0
  %393 = vmatpush2.bf16.msra.mxu0 %v318
  %394 = vmatprep.subr.bf16.mxu0 0
  %395 = vmatpush2.bf16.msra.mxu0 %v317
  %396 = vmatprep.subr.bf16.mxu0 0
  %397 = vmatpush2.bf16.msra.mxu0 %v316
  %398 = vmatprep.subr.bf16.mxu0 0
  %399 = vmatpush2.bf16.msra.mxu0 %v315
  %400 = vmatprep.subr.bf16.mxu0 0
  %401 = vmatpush2.bf16.msra.mxu0 %v314
  %402 = vmatprep.mubr.bf16.mxu0 %v147
  %403 = vmatmul.mubr.bf16.gmra.mxu0 %v146
  %v404 = vpop.f32.mrf.mxu0
  %v405 = vadd.f32 0.0, %v404
  %v406 = vpop.f32.mrf.mxu0
  %v407 = vpop.f32.mrf.mxu0
  %v408 = vadd.f32 0.0, %v407
  %v409 = vpop.f32.mrf.mxu0
  %410 = vmatprep.mubr.bf16.mxu0 %v151
  %411 = vmatmul.mubr.bf16.gmra.mxu0 %v150
  %v412 = vpop.f32.mrf.mxu0
  %v413 = vadd.f32 0.0, %v412
  %v414 = vpop.f32.mrf.mxu0
  %v415 = vpop.f32.mrf.mxu0
  %v416 = vadd.f32 0.0, %v415
  %v417 = vpop.f32.mrf.mxu0
  %418 = vmatprep.mubr.bf16.mxu0 %v155
  %419 = vmatmul.mubr.bf16.gmra.mxu0 %v154
  %v420 = vpop.f32.mrf.mxu0
  %v421 = vadd.f32 0.0, %v420
  %v422 = vpop.f32.mrf.mxu0
  %v423 = vpop.f32.mrf.mxu0
  %v424 = vadd.f32 0.0, %v423
  %v425 = vpop.f32.mrf.mxu0
  %426 = vmatprep.mubr.bf16.mxu0 %v159
  %427 = vmatmul.mubr.bf16.gmra.mxu0 %v158
  %v428 = vpop.f32.mrf.mxu0
  %v429 = vadd.f32 0.0, %v428
  %v430 = vpop.f32.mrf.mxu0
  %v431 = vpop.f32.mrf.mxu0
  %v432 = vadd.f32 0.0, %v431
  %v433 = vpop.f32.mrf.mxu0
  %434 = vdwg.mxu0
  %435 = vmatprep.subr.bf16.mxu0 0
  %436 = vmatpush1.bf16.msra.mxu0 %v329
  %437 = vmatprep.subr.bf16.mxu0 0
  %438 = vmatpush1.bf16.msra.mxu0 %v328
  %439 = vmatprep.subr.bf16.mxu0 0
  %440 = vmatpush1.bf16.msra.mxu0 %v327
  %441 = vmatprep.subr.bf16.mxu0 0
  %442 = vmatpush1.bf16.msra.mxu0 %v326
  %443 = vmatprep.subr.bf16.mxu0 0
  %444 = vmatpush1.bf16.msra.mxu0 %v325
  %445 = vmatprep.subr.bf16.mxu0 0
  %446 = vmatpush1.bf16.msra.mxu0 %v324
  %447 = vmatprep.subr.bf16.mxu0 0
  %448 = vmatpush1.bf16.msra.mxu0 %v323
  %449 = vmatprep.subr.bf16.mxu0 0
  %450 = vmatpush1.bf16.msra.mxu0 %v322
  %451 = vmatprep.subr.bf16.mxu0 0
  %452 = vmatpush2.bf16.msra.mxu0 %v337
  %453 = vmatprep.subr.bf16.mxu0 0
  %454 = vmatpush2.bf16.msra.mxu0 %v336
  %455 = vmatprep.subr.bf16.mxu0 0
  %456 = vmatpush2.bf16.msra.mxu0 %v335
  %457 = vmatprep.subr.bf16.mxu0 0
  %458 = vmatpush2.bf16.msra.mxu0 %v334
  %459 = vmatprep.subr.bf16.mxu0 0
  %460 = vmatpush2.bf16.msra.mxu0 %v333
  %461 = vmatprep.subr.bf16.mxu0 0
  %462 = vmatpush2.bf16.msra.mxu0 %v332
  %463 = vmatprep.subr.bf16.mxu0 0
  %464 = vmatpush2.bf16.msra.mxu0 %v331
  %465 = vmatprep.subr.bf16.mxu0 0
  %466 = vmatpush2.bf16.msra.mxu0 %v330
  %467 = vmatprep.mubr.bf16.mxu0 %v149
  %468 = vmatmul.mubr.bf16.gmra.mxu0 %v148
  %v469 = vpop.f32.mrf.mxu0
  %v470 = vadd.f32 %v405, %v469
  %v471 = vpop.f32.mrf.mxu0
  %v472 = vpop.f32.mrf.mxu0
  %v473 = vadd.f32 %v408, %v472
  %v474 = vpop.f32.mrf.mxu0
  %475 = vmatprep.mubr.bf16.mxu0 %v153
  %476 = vmatmul.mubr.bf16.gmra.mxu0 %v152
  %v477 = vpop.f32.mrf.mxu0
  %v478 = vadd.f32 %v413, %v477
  %v479 = vpop.f32.mrf.mxu0
  %v480 = vpop.f32.mrf.mxu0
  %v481 = vadd.f32 %v416, %v480
  %v482 = vpop.f32.mrf.mxu0
  %483 = vmatprep.mubr.bf16.mxu0 %v157
  %484 = vmatmul.mubr.bf16.gmra.mxu0 %v156
  %v485 = vpop.f32.mrf.mxu0
  %v486 = vadd.f32 %v421, %v485
  %v487 = vpop.f32.mrf.mxu0
  %v488 = vpop.f32.mrf.mxu0
  %v489 = vadd.f32 %v424, %v488
  %v490 = vpop.f32.mrf.mxu0
  %491 = vmatprep.mubr.bf16.mxu0 %v161
  %492 = vmatmul.mubr.bf16.gmra.mxu0 %v160
  %v493 = vpop.f32.mrf.mxu0
  %v494 = vadd.f32 %v429, %v493
  %v495 = vpop.f32.mrf.mxu0
  %v496 = vpop.f32.mrf.mxu0
  %v497 = vadd.f32 %v432, %v496
  %v498 = vpop.f32.mrf.mxu0
  %499 = vdwg.mxu0
  %vm500 = vcmask 261120
  %v501 = vsel %vm500, %v470, 0.0
  %502 = vadd.xlane.f32.xlu0 %v501
  %v503 = vpop.xlane.xlu0 %502
  %v504 = vsel %vm500, %v473, 0.0
  %505 = vadd.xlane.f32.xlu0 %v504
  %v506 = vpop.xlane.xlu0 %505
  %v507 = vsel %vm500, %v478, 0.0
  %508 = vadd.xlane.f32.xlu0 %v507
  %v509 = vpop.xlane.xlu0 %508
  %v510 = vsel %vm500, %v481, 0.0
  %511 = vadd.xlane.f32.xlu0 %v510
  %v512 = vpop.xlane.xlu0 %511
  %v513 = vsel %vm500, %v486, 0.0
  %514 = vadd.xlane.f32.xlu0 %v513
  %v515 = vpop.xlane.xlu0 %514
  %v516 = vsel %vm500, %v489, 0.0
  %517 = vadd.xlane.f32.xlu0 %v516
  %v518 = vpop.xlane.xlu0 %517
  %v519 = vsel %vm500, %v494, 0.0
  %520 = vadd.xlane.f32.xlu0 %v519
  %v521 = vpop.xlane.xlu0 %520
  %v522 = vsel %vm500, %v497, 0.0
  %523 = vadd.xlane.f32.xlu0 %v522
  %v524 = vpop.xlane.xlu0 %523
  %v525 = vmul.f32 %v503, 0.03125
  %v526 = vmul.f32 %v506, 0.03125
  %v527 = vmul.f32 %v509, 0.03125
  %v528 = vmul.f32 %v512, 0.03125
  %v529 = vmul.f32 %v515, 0.03125
  %v530 = vmul.f32 %v518, 0.03125
  %v531 = vmul.f32 %v521, 0.03125
  %v532 = vmul.f32 %v524, 0.03125
  %v533 = vsub.f32 %v470, %v525
  %v534 = vsub.f32 %v473, %v526
  %v535 = vsub.f32 %v478, %v527
  %v536 = vsub.f32 %v481, %v528
  %v537 = vsub.f32 %v486, %v529
  %v538 = vsub.f32 %v489, %v530
  %v539 = vsub.f32 %v494, %v531
  %v540 = vsub.f32 %v497, %v532
  %v541 = vmul.f32 %v533, %v533
  %v542 = vmul.f32 %v534, %v534
  %v543 = vmul.f32 %v535, %v535
  %v544 = vmul.f32 %v536, %v536
  %v545 = vmul.f32 %v537, %v537
  %v546 = vmul.f32 %v538, %v538
  %v547 = vmul.f32 %v539, %v539
  %v548 = vmul.f32 %v540, %v540
  %v549 = vsel %vm500, %v541, 0.0
  %550 = vadd.xlane.f32.xlu0 %v549
  %v551 = vpop.xlane.xlu0 %550
  %v552 = vsel %vm500, %v542, 0.0
  %553 = vadd.xlane.f32.xlu0 %v552
  %v554 = vpop.xlane.xlu0 %553
  %v555 = vsel %vm500, %v543, 0.0
  %556 = vadd.xlane.f32.xlu0 %v555
  %v557 = vpop.xlane.xlu0 %556
  %v558 = vsel %vm500, %v544, 0.0
  %559 = vadd.xlane.f32.xlu0 %v558
  %v560 = vpop.xlane.xlu0 %559
  %v561 = vsel %vm500, %v545, 0.0
  %562 = vadd.xlane.f32.xlu0 %v561
  %v563 = vpop.xlane.xlu0 %562
  %v564 = vsel %vm500, %v546, 0.0
  %565 = vadd.xlane.f32.xlu0 %v564
  %v566 = vpop.xlane.xlu0 %565
  %v567 = vsel %vm500, %v547, 0.0
  %568 = vadd.xlane.f32.xlu0 %v567
  %v569 = vpop.xlane.xlu0 %568
  %v570 = vsel %vm500, %v548, 0.0
  %571 = vadd.xlane.f32.xlu0 %v570
  %v572 = vpop.xlane.xlu0 %571
  %v573 = vmul.f32 %v551, 0.03125
  %v574 = vmul.f32 %v554, 0.03125
  %v575 = vmul.f32 %v557, 0.03125
  %v576 = vmul.f32 %v560, 0.03125
  %v577 = vmul.f32 %v563, 0.03125
  %v578 = vmul.f32 %v566, 0.03125
  %v579 = vmul.f32 %v569, 0.03125
  %v580 = vmul.f32 %v572, 0.03125
  %v581 = vadd.f32 %v573, 1e-05
  %v582 = vadd.f32 %v574, 1e-05
  %v583 = vadd.f32 %v575, 1e-05
  %v584 = vadd.f32 %v576, 1e-05
  %v585 = vadd.f32 %v577, 1e-05
  %v586 = vadd.f32 %v578, 1e-05
  %v587 = vadd.f32 %v579, 1e-05
  %v588 = vadd.f32 %v580, 1e-05
  %v589 = vrsqrt.pop %v581
  %v590 = vrsqrt.pop %v582
  %v591 = vrsqrt.pop %v583
  %v592 = vrsqrt.pop %v584
  %v593 = vrsqrt.pop %v585
  %v594 = vrsqrt.pop %v586
  %v595 = vrsqrt.pop %v587
  %v596 = vrsqrt.pop %v588
  %v597 = vmul.f32 %v533, %v589
  %v598 = vmul.f32 %v534, %v590
  %v599 = vmul.f32 %v535, %v591
  %v600 = vmul.f32 %v536, %v592
  %v601 = vmul.f32 %v537, %v593
  %v602 = vmul.f32 %v538, %v594
  %v603 = vmul.f32 %v539, %v595
  %v604 = vmul.f32 %v540, %v596
  %v605 = vld [vmem:[%s2] sm:$0xff]
  %v606 = vld [vmem:[%s2 + $0x8] sm:$0xff]
  %v607 = vld [vmem:[%s2 + $0x10] sm:$0xff]
  %v608 = vld [vmem:[%s2 + $0x18] sm:$0xff]
  %v609 = vld [vmem:[%s2 + $0x20] sm:$0xff]
  %v610 = vld [vmem:[%s2 + $0x28] sm:$0xff]
  %v611 = vld [vmem:[%s2 + $0x30] sm:$0xff]
  %v612 = vld [vmem:[%s2 + $0x38] sm:$0xff]
  %614 = vset.pattern.permute.xlu0 0
  %615 = vperm.xlu0 %614, %v605
  %v616 = vpop.permute.xlu0 %615
  %619 = vset.pattern.permute.xlu0 0
  %620 = vperm.xlu0 %619, %v606
  %v621 = vpop.permute.xlu0 %620
  %624 = vset.pattern.permute.xlu0 0
  %625 = vperm.xlu0 %624, %v607
  %v626 = vpop.permute.xlu0 %625
  %629 = vset.pattern.permute.xlu0 0
  %630 = vperm.xlu0 %629, %v608
  %v631 = vpop.permute.xlu0 %630
  %634 = vset.pattern.permute.xlu0 0
  %635 = vperm.xlu0 %634, %v609
  %v636 = vpop.permute.xlu0 %635
  %639 = vset.pattern.permute.xlu0 0
  %640 = vperm.xlu0 %639, %v610
  %v641 = vpop.permute.xlu0 %640
  %644 = vset.pattern.permute.xlu0 0
  %645 = vperm.xlu0 %644, %v611
  %v646 = vpop.permute.xlu0 %645
  %649 = vset.pattern.permute.xlu0 0
  %650 = vperm.xlu0 %649, %v612
  %v651 = vpop.permute.xlu0 %650
  %v653 = vmul.f32 %v597, %v616
  %v654 = vmul.f32 %v598, %v621
  %v655 = vmul.f32 %v599, %v626
  %v656 = vmul.f32 %v600, %v631
  %v657 = vmul.f32 %v601, %v636
  %v658 = vmul.f32 %v602, %v641
  %v659 = vmul.f32 %v603, %v646
  %v660 = vmul.f32 %v604, %v651
  %v661 = vld [vmem:[%s3] sm:$0xff]
  %v662 = vld [vmem:[%s3 + $0x8] sm:$0xff]
  %v663 = vld [vmem:[%s3 + $0x10] sm:$0xff]
  %v664 = vld [vmem:[%s3 + $0x18] sm:$0xff]
  %v665 = vld [vmem:[%s3 + $0x20] sm:$0xff]
  %v666 = vld [vmem:[%s3 + $0x28] sm:$0xff]
  %v667 = vld [vmem:[%s3 + $0x30] sm:$0xff]
  %v668 = vld [vmem:[%s3 + $0x38] sm:$0xff]
  %670 = vset.pattern.permute.xlu0 0
  %671 = vperm.xlu0 %670, %v661
  %v672 = vpop.permute.xlu0 %671
  %675 = vset.pattern.permute.xlu0 0
  %676 = vperm.xlu0 %675, %v662
  %v677 = vpop.permute.xlu0 %676
  %680 = vset.pattern.permute.xlu0 0
  %681 = vperm.xlu0 %680, %v663
  %v682 = vpop.permute.xlu0 %681
  %685 = vset.pattern.permute.xlu0 0
  %686 = vperm.xlu0 %685, %v664
  %v687 = vpop.permute.xlu0 %686
  %690 = vset.pattern.permute.xlu0 0
  %691 = vperm.xlu0 %690, %v665
  %v692 = vpop.permute.xlu0 %691
  %695 = vset.pattern.permute.xlu0 0
  %696 = vperm.xlu0 %695, %v666
  %v697 = vpop.permute.xlu0 %696
  %700 = vset.pattern.permute.xlu0 0
  %701 = vperm.xlu0 %700, %v667
  %v702 = vpop.permute.xlu0 %701
  %705 = vset.pattern.permute.xlu0 0
  %706 = vperm.xlu0 %705, %v668
  %v707 = vpop.permute.xlu0 %706
  %v709 = vadd.f32 %v653, %v672
  %v710 = vadd.f32 %v654, %v677
  %v711 = vadd.f32 %v655, %v682
  %v712 = vadd.f32 %v656, %v687
  %v713 = vadd.f32 %v657, %v692
  %v714 = vadd.f32 %v658, %v697
  %v715 = vadd.f32 %v659, %v702
  %v716 = vadd.f32 %v660, %v707
  %vm717 = vcmp.ge.f32.partialorder %v709, 0.0
  %vm718 = vcmp.ge.f32.partialorder %v710, 0.0
  %vm719 = vcmp.ge.f32.partialorder %v711, 0.0
  %vm720 = vcmp.ge.f32.partialorder %v712, 0.0
  %vm721 = vcmp.ge.f32.partialorder %v713, 0.0
  %vm722 = vcmp.ge.f32.partialorder %v714, 0.0
  %vm723 = vcmp.ge.f32.partialorder %v715, 0.0
  %vm724 = vcmp.ge.f32.partialorder %v716, 0.0
  %v725 = vmul.f32 %v709, 0.2
  %v726 = vmul.f32 %v710, 0.2
  %v727 = vmul.f32 %v711, 0.2
  %v728 = vmul.f32 %v712, 0.2
  %v729 = vmul.f32 %v713, 0.2
  %v730 = vmul.f32 %v714, 0.2
  %v731 = vmul.f32 %v715, 0.2
  %v732 = vmul.f32 %v716, 0.2
  %v733 = vsel %vm717, %v709, %v725
  %v734 = vsel %vm718, %v710, %v726
  %v735 = vsel %vm719, %v711, %v727
  %v736 = vsel %vm720, %v712, %v728
  %v737 = vsel %vm721, %v713, %v729
  %v738 = vsel %vm722, %v714, %v730
  %v739 = vsel %vm723, %v715, %v731
  %v740 = vsel %vm724, %v716, %v732
  %v741 = vpack.c.bf16 %v734, %v733
  %v742 = vpack.c.bf16 %v736, %v735
  %v743 = vpack.c.bf16 %v738, %v737
  %v744 = vpack.c.bf16 %v740, %v739
  %v749 = vunpack.c.l.b16 %v741
  %v750 = vunpack.c.h.b16 %v741
  %v751 = vunpack.c.l.b16 %v742
  %v752 = vunpack.c.h.b16 %v742
  %v753 = vunpack.c.l.b16 %v743
  %v754 = vunpack.c.h.b16 %v743
  %v755 = vunpack.c.l.b16 %v744
  %v756 = vunpack.c.h.b16 %v744
  %v757 = vpack.c.b16 %v749, %v749
  %v758 = vpack.c.b16 %v750, %v750
  %v759 = vpack.c.b16 %v751, %v751
  %v760 = vpack.c.b16 %v752, %v752
  %v761 = vpack.c.b16 %v753, %v753
  %v762 = vpack.c.b16 %v754, %v754
  %v763 = vpack.c.b16 %v755, %v755
  %v764 = vpack.c.b16 %v756, %v756
  %vm773 = vcmask 257024
  %774 = vst.msk [vmem:[%s4] sm:$0xf] %vm773, %v757
  %775 = vst.msk [vmem:[%s4 + $0x4] sm:$0xf] %vm773, %v758
  %776 = vst.msk [vmem:[%s4 + $0x8] sm:$0xf] %vm773, %v759
  %777 = vst.msk [vmem:[%s4 + $0xc] sm:$0xf] %vm773, %v760
  %778 = vst.msk [vmem:[%s4 + $0x10] sm:$0xf] %vm773, %v761
  %779 = vst.msk [vmem:[%s4 + $0x14] sm:$0xf] %vm773, %v762
  %780 = vst.msk [vmem:[%s4 + $0x18] sm:$0xf] %vm773, %v763
  %781 = vst.msk [vmem:[%s4 + $0x1c] sm:$0xf] %vm773, %v764
  // Predicated region
  $region18: #{discriminator_forward.8} parent=0 // pred_check
    _
  $region19: #{discriminator_forward.8} parent=0 // pred_check_branch
    %783 = sbr.rel (0) target = $region21
  $region20: #{discriminator_forward.8} parent=0 // pred_region
    _
  $region21: #{discriminator_forward.8} parent=0 // pred_fallthru
    _
  // Predicated region
  $region22: #{discriminator_forward.8} parent=0 // pred_check
    _
  $region23: #{discriminator_forward.8} parent=0 // pred_check_branch
    %785 = sbr.rel (0) target = $region25
  $region24: #{discriminator_forward.8} parent=0 // pred_region
    _
  $region25: #{discriminator_forward.8} parent=0 // pred_fallthru
    _

// kernel: discriminator_forward.9
$region0: #{discriminator_forward.9}
  #allocation0 [shape = 'u32[]', space=smem, size = 0x4, offset = 0x4, fixed_abs, tag = 'smem constant byte address 0x4 - core index']
  #allocation1 [shape = 'u32[144,128]{1,0:T(1,128)}', space=vmem, size = 0x12000, scoped, tag = 'internal scratch']
  %s0 = inlined_call_operand.vmem [shape: bf16[1,1024], index: 0, kind: input, shape index: {}]
  %s1 = inlined_call_operand.vmem [shape: bf16[1024,2], index: 1, kind: input, shape index: {}]
  %s2 = inlined_call_operand.hbm [shape: f32[1,2], index: 2, kind: output, shape index: {}]
  %s3 = sld [smem:[#allocation0]]
  $region18: #{discriminator_forward.9} parent=0
    _
  %s5 = ssub.s32 1, %s3
  %s6 = scalar_select 0, %s5, %s3
  $region1: #{discriminator_forward.9} parent=0
    #allocation2 [shape = 'u8[512]{0}', space=vmem, size = 0x400, scoped, tag = 'output window, operand 0, single buffered']
    #allocation3 [shape = 's32[1]{0}', space=sflag, size = 0x4, scoped, tag = 'scoped memory for discriminator_forward.9']
    %7 = vsyncpa [#allocation3], 0
    // Predicated region
    $region2: #{discriminator_forward.9} parent=1 // pred_check
      _
    $region3: #{discriminator_forward.9} parent=1 // pred_check_branch
      %9 = sbr.rel (0) target = $region5
    $region4: #{discriminator_forward.9} parent=1 // pred_region
      _
    $region5: #{discriminator_forward.9} parent=1 // pred_fallthru
      _
    // Predicated region
    $region6: #{discriminator_forward.9} parent=1 // pred_check
      _
    $region7: #{discriminator_forward.9} parent=1 // pred_check_branch
      %11 = sbr.rel (0) target = $region9
    $region8: #{discriminator_forward.9} parent=1 // pred_region
      _
    $region9: #{discriminator_forward.9} parent=1 // pred_fallthru
      _
    %v13 = vld [vmem:[%s0] sm:$0xff]
    %v14 = vld [vmem:[%s1] sm:$0xf]
    %v15 = vld [vmem:[%s1 + $0x4] sm:$0xf]
    %v16 = vld [vmem:[%s1 + $0x8] sm:$0xf]
    %v17 = vld [vmem:[%s1 + $0xc] sm:$0xf]
    %v18 = vld [vmem:[%s1 + $0x10] sm:$0xf]
    %v19 = vld [vmem:[%s1 + $0x14] sm:$0xf]
    %v20 = vld [vmem:[%s1 + $0x18] sm:$0xf]
    %v21 = vld [vmem:[%s1 + $0x1c] sm:$0xf]
    %v22 = vld [vmem:[%s1 + $0x20] sm:$0xf]
    %v23 = vld [vmem:[%s1 + $0x24] sm:$0xf]
    %v24 = vld [vmem:[%s1 + $0x28] sm:$0xf]
    %v25 = vld [vmem:[%s1 + $0x2c] sm:$0xf]
    %v26 = vld [vmem:[%s1 + $0x30] sm:$0xf]
    %v27 = vld [vmem:[%s1 + $0x34] sm:$0xf]
    %v28 = vld [vmem:[%s1 + $0x38] sm:$0xf]
    %v29 = vld [vmem:[%s1 + $0x3c] sm:$0xf]
    %v30 = vld [vmem:[%s1 + $0x40] sm:$0xf]
    %v31 = vld [vmem:[%s1 + $0x44] sm:$0xf]
    %v32 = vld [vmem:[%s1 + $0x48] sm:$0xf]
    %v33 = vld [vmem:[%s1 + $0x4c] sm:$0xf]
    %v34 = vld [vmem:[%s1 + $0x50] sm:$0xf]
    %v35 = vld [vmem:[%s1 + $0x54] sm:$0xf]
    %v36 = vld [vmem:[%s1 + $0x58] sm:$0xf]
    %v37 = vld [vmem:[%s1 + $0x5c] sm:$0xf]
    %v38 = vld [vmem:[%s1 + $0x60] sm:$0xf]
    %v39 = vld [vmem:[%s1 + $0x64] sm:$0xf]
    %v40 = vld [vmem:[%s1 + $0x68] sm:$0xf]
    %v41 = vld [vmem:[%s1 + $0x6c] sm:$0xf]
    %v42 = vld [vmem:[%s1 + $0x70] sm:$0xf]
    %v43 = vld [vmem:[%s1 + $0x74] sm:$0xf]
    %v44 = vld [vmem:[%s1 + $0x78] sm:$0xf]
    %v45 = vld [vmem:[%s1 + $0x7c] sm:$0xf]
    %v46 = vld [vmem:[%s1 + $0x80] sm:$0xf]
    %v47 = vld [vmem:[%s1 + $0x84] sm:$0xf]
    %v48 = vld [vmem:[%s1 + $0x88] sm:$0xf]
    %v49 = vld [vmem:[%s1 + $0x8c] sm:$0xf]
    %v50 = vld [vmem:[%s1 + $0x90] sm:$0xf]
    %v51 = vld [vmem:[%s1 + $0x94] sm:$0xf]
    %v52 = vld [vmem:[%s1 + $0x98] sm:$0xf]
    %v53 = vld [vmem:[%s1 + $0x9c] sm:$0xf]
    %v54 = vld [vmem:[%s1 + $0xa0] sm:$0xf]
    %v55 = vld [vmem:[%s1 + $0xa4] sm:$0xf]
    %v56 = vld [vmem:[%s1 + $0xa8] sm:$0xf]
    %v57 = vld [vmem:[%s1 + $0xac] sm:$0xf]
    %v58 = vld [vmem:[%s1 + $0xb0] sm:$0xf]
    %v59 = vld [vmem:[%s1 + $0xb4] sm:$0xf]
    %v60 = vld [vmem:[%s1 + $0xb8] sm:$0xf]
    %v61 = vld [vmem:[%s1 + $0xbc] sm:$0xf]
    %v62 = vld [vmem:[%s1 + $0xc0] sm:$0xf]
    %v63 = vld [vmem:[%s1 + $0xc4] sm:$0xf]
    %v64 = vld [vmem:[%s1 + $0xc8] sm:$0xf]
    %v65 = vld [vmem:[%s1 + $0xcc] sm:$0xf]
    %v66 = vld [vmem:[%s1 + $0xd0] sm:$0xf]
    %v67 = vld [vmem:[%s1 + $0xd4] sm:$0xf]
    %v68 = vld [vmem:[%s1 + $0xd8] sm:$0xf]
    %v69 = vld [vmem:[%s1 + $0xdc] sm:$0xf]
    %v70 = vld [vmem:[%s1 + $0xe0] sm:$0xf]
    %v71 = vld [vmem:[%s1 + $0xe4] sm:$0xf]
    %v72 = vld [vmem:[%s1 + $0xe8] sm:$0xf]
    %v73 = vld [vmem:[%s1 + $0xec] sm:$0xf]
    %v74 = vld [vmem:[%s1 + $0xf0] sm:$0xf]
    %v75 = vld [vmem:[%s1 + $0xf4] sm:$0xf]
    %v76 = vld [vmem:[%s1 + $0xf8] sm:$0xf]
    %v77 = vld [vmem:[%s1 + $0xfc] sm:$0xf]
    %v78 = vld [vmem:[%s1 + $0x100] sm:$0xf]
    %v79 = vld [vmem:[%s1 + $0x104] sm:$0xf]
    %v80 = vld [vmem:[%s1 + $0x108] sm:$0xf]
    %v81 = vld [vmem:[%s1 + $0x10c] sm:$0xf]
    %v82 = vld [vmem:[%s1 + $0x110] sm:$0xf]
    %v83 = vld [vmem:[%s1 + $0x114] sm:$0xf]
    %v84 = vld [vmem:[%s1 + $0x118] sm:$0xf]
    %v85 = vld [vmem:[%s1 + $0x11c] sm:$0xf]
    %v86 = vld [vmem:[%s1 + $0x120] sm:$0xf]
    %v87 = vld [vmem:[%s1 + $0x124] sm:$0xf]
    %v88 = vld [vmem:[%s1 + $0x128] sm:$0xf]
    %v89 = vld [vmem:[%s1 + $0x12c] sm:$0xf]
    %v90 = vld [vmem:[%s1 + $0x130] sm:$0xf]
    %v91 = vld [vmem:[%s1 + $0x134] sm:$0xf]
    %v92 = vld [vmem:[%s1 + $0x138] sm:$0xf]
    %v93 = vld [vmem:[%s1 + $0x13c] sm:$0xf]
    %v94 = vld [vmem:[%s1 + $0x140] sm:$0xf]
    %v95 = vld [vmem:[%s1 + $0x144] sm:$0xf]
    %v96 = vld [vmem:[%s1 + $0x148] sm:$0xf]
    %v97 = vld [vmem:[%s1 + $0x14c] sm:$0xf]
    %v98 = vld [vmem:[%s1 + $0x150] sm:$0xf]
    %v99 = vld [vmem:[%s1 + $0x154] sm:$0xf]
    %v100 = vld [vmem:[%s1 + $0x158] sm:$0xf]
    %v101 = vld [vmem:[%s1 + $0x15c] sm:$0xf]
    %v102 = vld [vmem:[%s1 + $0x160] sm:$0xf]
    %v103 = vld [vmem:[%s1 + $0x164] sm:$0xf]
    %v104 = vld [vmem:[%s1 + $0x168] sm:$0xf]
    %v105 = vld [vmem:[%s1 + $0x16c] sm:$0xf]
    %v106 = vld [vmem:[%s1 + $0x170] sm:$0xf]
    %v107 = vld [vmem:[%s1 + $0x174] sm:$0xf]
    %v108 = vld [vmem:[%s1 + $0x178] sm:$0xf]
    %v109 = vld [vmem:[%s1 + $0x17c] sm:$0xf]
    %v110 = vld [vmem:[%s1 + $0x180] sm:$0xf]
    %v111 = vld [vmem:[%s1 + $0x184] sm:$0xf]
    %v112 = vld [vmem:[%s1 + $0x188] sm:$0xf]
    %v113 = vld [vmem:[%s1 + $0x18c] sm:$0xf]
    %v114 = vld [vmem:[%s1 + $0x190] sm:$0xf]
    %v115 = vld [vmem:[%s1 + $0x194] sm:$0xf]
    %v116 = vld [vmem:[%s1 + $0x198] sm:$0xf]
    %v117 = vld [vmem:[%s1 + $0x19c] sm:$0xf]
    %v118 = vld [vmem:[%s1 + $0x1a0] sm:$0xf]
    %v119 = vld [vmem:[%s1 + $0x1a4] sm:$0xf]
    %v120 = vld [vmem:[%s1 + $0x1a8] sm:$0xf]
    %v121 = vld [vmem:[%s1 + $0x1ac] sm:$0xf]
    %v122 = vld [vmem:[%s1 + $0x1b0] sm:$0xf]
    %v123 = vld [vmem:[%s1 + $0x1b4] sm:$0xf]
    %v124 = vld [vmem:[%s1 + $0x1b8] sm:$0xf]
    %v125 = vld [vmem:[%s1 + $0x1bc] sm:$0xf]
    %v126 = vld [vmem:[%s1 + $0x1c0] sm:$0xf]
    %v127 = vld [vmem:[%s1 + $0x1c4] sm:$0xf]
    %v128 = vld [vmem:[%s1 + $0x1c8] sm:$0xf]
    %v129 = vld [vmem:[%s1 + $0x1cc] sm:$0xf]
    %v130 = vld [vmem:[%s1 + $0x1d0] sm:$0xf]
    %v131 = vld [vmem:[%s1 + $0x1d4] sm:$0xf]
    %v132 = vld [vmem:[%s1 + $0x1d8] sm:$0xf]
    %v133 = vld [vmem:[%s1 + $0x1dc] sm:$0xf]
    %v134 = vld [vmem:[%s1 + $0x1e0] sm:$0xf]
    %v135 = vld [vmem:[%s1 + $0x1e4] sm:$0xf]
    %v136 = vld [vmem:[%s1 + $0x1e8] sm:$0xf]
    %v137 = vld [vmem:[%s1 + $0x1ec] sm:$0xf]
    %v138 = vld [vmem:[%s1 + $0x1f0] sm:$0xf]
    %v139 = vld [vmem:[%s1 + $0x1f4] sm:$0xf]
    %v140 = vld [vmem:[%s1 + $0x1f8] sm:$0xf]
    %v141 = vld [vmem:[%s1 + $0x1fc] sm:$0xf]
    %v143 = vcombine.high %v13, %v13
    %v145 = vunpack.c.l.s4 1966171168
    %v146 = vunpack.c.0.s8 %v145
    %v147 = vlaneseq
    %v148 = vshrl.u32 %v147, 7
    %v149 = vsub.s32 %v146, %v148
    %v150 = vrot.slane %v13, %v149
    %v152 = vunpack.c.l.s4 1966171168
    %v153 = vunpack.c.0.s8 %v152
    %v154 = vlaneseq
    %v155 = vshrl.u32 %v154, 7
    %v156 = vsub.s32 %v153, %v155
    %v157 = vrot.slane %v143, %v156
    %v158 = vcombine.high %v150, %v150
    %v159 = vcombine.high %v157, %v157
    %v161 = vunpack.c.l.s4 1966171168
    %v162 = vunpack.c.0.s8 %v161
    %v163 = vlaneseq
    %v164 = vshrl.u32 %v163, 7
    %v165 = vsub.s32 %v162, %v164
    %v166 = vrot.slane %v150, %v165
    %v168 = vunpack.c.l.s4 1966171168
    %v169 = vunpack.c.0.s8 %v168
    %v170 = vlaneseq
    %v171 = vshrl.u32 %v170, 7
    %v172 = vsub.s32 %v169, %v171
    %v173 = vrot.slane %v157, %v172
    %v175 = vunpack.c.l.s4 1966171168
    %v176 = vunpack.c.0.s8 %v175
    %v177 = vlaneseq
    %v178 = vshrl.u32 %v177, 7
    %v179 = vsub.s32 %v176, %v178
    %v180 = vrot.slane %v158, %v179
    %v182 = vunpack.c.l.s4 1966171168
    %v183 = vunpack.c.0.s8 %v182
    %v184 = vlaneseq
    %v185 = vshrl.u32 %v184, 7
    %v186 = vsub.s32 %v183, %v185
    %v187 = vrot.slane %v159, %v186
    %v188 = vcombine.high %v166, %v166
    %v189 = vcombine.high %v173, %v173
    %v190 = vcombine.high %v180, %v180
    %v191 = vcombine.high %v187, %v187
    %v328 = vunpack.c.l.b16 %v14
    %v329 = vunpack.c.l.b16 %v15
    %v330 = vunpack.c.l.b16 %v16
    %v331 = vunpack.c.l.b16 %v17
    %v332 = vunpack.c.l.b16 %v18
    %v333 = vunpack.c.l.b16 %v19
    %v334 = vunpack.c.l.b16 %v20
    %v335 = vunpack.c.l.b16 %v21
    %v336 = vunpack.c.l.b16 %v22
    %v337 = vunpack.c.l.b16 %v23
    %v338 = vunpack.c.l.b16 %v24
    %v339 = vunpack.c.l.b16 %v25
    %v340 = vunpack.c.l.b16 %v26
    %v341 = vunpack.c.l.b16 %v27
    %v342 = vunpack.c.l.b16 %v28
    %v343 = vunpack.c.l.b16 %v29
    %v344 = vunpack.c.l.b16 %v30
    %v345 = vunpack.c.l.b16 %v31
    %v346 = vunpack.c.l.b16 %v32
    %v347 = vunpack.c.l.b16 %v33
    %v348 = vunpack.c.l.b16 %v34
    %v349 = vunpack.c.l.b16 %v35
    %v350 = vunpack.c.l.b16 %v36
    %v351 = vunpack.c.l.b16 %v37
    %v352 = vunpack.c.l.b16 %v38
    %v353 = vunpack.c.l.b16 %v39
    %v354 = vunpack.c.l.b16 %v40
    %v355 = vunpack.c.l.b16 %v41
    %v356 = vunpack.c.l.b16 %v42
    %v357 = vunpack.c.l.b16 %v43
    %v358 = vunpack.c.l.b16 %v44
    %v359 = vunpack.c.l.b16 %v45
    %v360 = vunpack.c.l.b16 %v46
    %v361 = vunpack.c.l.b16 %v47
    %v362 = vunpack.c.l.b16 %v48
    %v363 = vunpack.c.l.b16 %v49
    %v364 = vunpack.c.l.b16 %v50
    %v365 = vunpack.c.l.b16 %v51
    %v366 = vunpack.c.l.b16 %v52
    %v367 = vunpack.c.l.b16 %v53
    %v368 = vunpack.c.l.b16 %v54
    %v369 = vunpack.c.l.b16 %v55
    %v370 = vunpack.c.l.b16 %v56
    %v371 = vunpack.c.l.b16 %v57
    %v372 = vunpack.c.l.b16 %v58
    %v373 = vunpack.c.l.b16 %v59
    %v374 = vunpack.c.l.b16 %v60
    %v375 = vunpack.c.l.b16 %v61
    %v376 = vunpack.c.l.b16 %v62
    %v377 = vunpack.c.l.b16 %v63
    %v378 = vunpack.c.l.b16 %v64
    %v379 = vunpack.c.l.b16 %v65
    %v380 = vunpack.c.l.b16 %v66
    %v381 = vunpack.c.l.b16 %v67
    %v382 = vunpack.c.l.b16 %v68
    %v383 = vunpack.c.l.b16 %v69
    %v384 = vunpack.c.l.b16 %v70
    %v385 = vunpack.c.l.b16 %v71
    %v386 = vunpack.c.l.b16 %v72
    %v387 = vunpack.c.l.b16 %v73
    %v388 = vunpack.c.l.b16 %v74
    %v389 = vunpack.c.l.b16 %v75
    %v390 = vunpack.c.l.b16 %v76
    %v391 = vunpack.c.l.b16 %v77
    %v392 = vunpack.c.l.b16 %v78
    %v393 = vunpack.c.l.b16 %v79
    %v394 = vunpack.c.l.b16 %v80
    %v395 = vunpack.c.l.b16 %v81
    %v396 = vunpack.c.l.b16 %v82
    %v397 = vunpack.c.l.b16 %v83
    %v398 = vunpack.c.l.b16 %v84
    %v399 = vunpack.c.l.b16 %v85
    %v400 = vunpack.c.l.b16 %v86
    %v401 = vunpack.c.l.b16 %v87
    %v402 = vunpack.c.l.b16 %v88
    %v403 = vunpack.c.l.b16 %v89
    %v404 = vunpack.c.l.b16 %v90
    %v405 = vunpack.c.l.b16 %v91
    %v406 = vunpack.c.l.b16 %v92
    %v407 = vunpack.c.l.b16 %v93
    %v408 = vunpack.c.l.b16 %v94
    %v409 = vunpack.c.l.b16 %v95
    %v410 = vunpack.c.l.b16 %v96
    %v411 = vunpack.c.l.b16 %v97
    %v412 = vunpack.c.l.b16 %v98
    %v413 = vunpack.c.l.b16 %v99
    %v414 = vunpack.c.l.b16 %v100
    %v415 = vunpack.c.l.b16 %v101
    %v416 = vunpack.c.l.b16 %v102
    %v417 = vunpack.c.l.b16 %v103
    %v418 = vunpack.c.l.b16 %v104
    %v419 = vunpack.c.l.b16 %v105
    %v420 = vunpack.c.l.b16 %v106
    %v421 = vunpack.c.l.b16 %v107
    %v422 = vunpack.c.l.b16 %v108
    %v423 = vunpack.c.l.b16 %v109
    %v424 = vunpack.c.l.b16 %v110
    %v425 = vunpack.c.l.b16 %v111
    %v426 = vunpack.c.l.b16 %v112
    %v427 = vunpack.c.l.b16 %v113
    %v428 = vunpack.c.l.b16 %v114
    %v429 = vunpack.c.l.b16 %v115
    %v430 = vunpack.c.l.b16 %v116
    %v431 = vunpack.c.l.b16 %v117
    %v432 = vunpack.c.l.b16 %v118
    %v433 = vunpack.c.l.b16 %v119
    %v434 = vunpack.c.l.b16 %v120
    %v435 = vunpack.c.l.b16 %v121
    %v436 = vunpack.c.l.b16 %v122
    %v437 = vunpack.c.l.b16 %v123
    %v438 = vunpack.c.l.b16 %v124
    %v439 = vunpack.c.l.b16 %v125
    %v440 = vunpack.c.l.b16 %v126
    %v441 = vunpack.c.l.b16 %v127
    %v442 = vunpack.c.l.b16 %v128
    %v443 = vunpack.c.l.b16 %v129
    %v444 = vunpack.c.l.b16 %v130
    %v445 = vunpack.c.l.b16 %v131
    %v446 = vunpack.c.l.b16 %v132
    %v447 = vunpack.c.l.b16 %v133
    %v448 = vunpack.c.l.b16 %v134
    %v449 = vunpack.c.l.b16 %v135
    %v450 = vunpack.c.l.b16 %v136
    %v451 = vunpack.c.l.b16 %v137
    %v452 = vunpack.c.l.b16 %v138
    %v453 = vunpack.c.l.b16 %v139
    %v454 = vunpack.c.l.b16 %v140
    %v455 = vunpack.c.l.b16 %v141
    %v456 = vpack.c.b16 %v329, %v328
    %v457 = vpack.c.b16 %v331, %v330
    %v458 = vpack.c.b16 %v333, %v332
    %v459 = vpack.c.b16 %v335, %v334
    %v460 = vpack.c.b16 %v337, %v336
    %v461 = vpack.c.b16 %v339, %v338
    %v462 = vpack.c.b16 %v341, %v340
    %v463 = vpack.c.b16 %v343, %v342
    %v464 = vpack.c.b16 %v345, %v344
    %v465 = vpack.c.b16 %v347, %v346
    %v466 = vpack.c.b16 %v349, %v348
    %v467 = vpack.c.b16 %v351, %v350
    %v468 = vpack.c.b16 %v353, %v352
    %v469 = vpack.c.b16 %v355, %v354
    %v470 = vpack.c.b16 %v357, %v356
    %v471 = vpack.c.b16 %v359, %v358
    %v472 = vpack.c.b16 %v361, %v360
    %v473 = vpack.c.b16 %v363, %v362
    %v474 = vpack.c.b16 %v365, %v364
    %v475 = vpack.c.b16 %v367, %v366
    %v476 = vpack.c.b16 %v369, %v368
    %v477 = vpack.c.b16 %v371, %v370
    %v478 = vpack.c.b16 %v373, %v372
    %v479 = vpack.c.b16 %v375, %v374
    %v480 = vpack.c.b16 %v377, %v376
    %v481 = vpack.c.b16 %v379, %v378
    %v482 = vpack.c.b16 %v381, %v380
    %v483 = vpack.c.b16 %v383, %v382
    %v484 = vpack.c.b16 %v385, %v384
    %v485 = vpack.c.b16 %v387, %v386
    %v486 = vpack.c.b16 %v389, %v388
    %v487 = vpack.c.b16 %v391, %v390
    %v488 = vpack.c.b16 %v393, %v392
    %v489 = vpack.c.b16 %v395, %v394
    %v490 = vpack.c.b16 %v397, %v396
    %v491 = vpack.c.b16 %v399, %v398
    %v492 = vpack.c.b16 %v401, %v400
    %v493 = vpack.c.b16 %v403, %v402
    %v494 = vpack.c.b16 %v405, %v404
    %v495 = vpack.c.b16 %v407, %v406
    %v496 = vpack.c.b16 %v409, %v408
    %v497 = vpack.c.b16 %v411, %v410
    %v498 = vpack.c.b16 %v413, %v412
    %v499 = vpack.c.b16 %v415, %v414
    %v500 = vpack.c.b16 %v417, %v416
    %v501 = vpack.c.b16 %v419, %v418
    %v502 = vpack.c.b16 %v421, %v420
    %v503 = vpack.c.b16 %v423, %v422
    %v504 = vpack.c.b16 %v425, %v424
    %v505 = vpack.c.b16 %v427, %v426
    %v506 = vpack.c.b16 %v429, %v428
    %v507 = vpack.c.b16 %v431, %v430
    %v508 = vpack.c.b16 %v433, %v432
    %v509 = vpack.c.b16 %v435, %v434
    %v510 = vpack.c.b16 %v437, %v436
    %v511 = vpack.c.b16 %v439, %v438
    %v512 = vpack.c.b16 %v441, %v440
    %v513 = vpack.c.b16 %v443, %v442
    %v514 = vpack.c.b16 %v445, %v444
    %v515 = vpack.c.b16 %v447, %v446
    %v516 = vpack.c.b16 %v449, %v448
    %v517 = vpack.c.b16 %v451, %v450
    %v518 = vpack.c.b16 %v453, %v452
    %v519 = vpack.c.b16 %v455, %v454
    %584 = vmatprep.subr.bf16.mxu0 0
    %585 = vmatpush1.bf16.msra.mxu0 %v463
    %586 = vmatprep.subr.bf16.mxu0 0
    %587 = vmatpush1.bf16.msra.mxu0 %v462
    %588 = vmatprep.subr.bf16.mxu0 0
    %589 = vmatpush1.bf16.msra.mxu0 %v461
    %590 = vmatprep.subr.bf16.mxu0 0
    %591 = vmatpush1.bf16.msra.mxu0 %v460
    %592 = vmatprep.subr.bf16.mxu0 0
    %593 = vmatpush1.bf16.msra.mxu0 %v459
    %594 = vmatprep.subr.bf16.mxu0 0
    %595 = vmatpush1.bf16.msra.mxu0 %v458
    %596 = vmatprep.subr.bf16.mxu0 0
    %597 = vmatpush1.bf16.msra.mxu0 %v457
    %598 = vmatprep.subr.bf16.mxu0 0
    %599 = vmatpush1.bf16.msra.mxu0 %v456
    %600 = vmatprep.subr.bf16.mxu0 0
    %601 = vmatpush2.bf16.msra.mxu0 %v471
    %602 = vmatprep.subr.bf16.mxu0 0
    %603 = vmatpush2.bf16.msra.mxu0 %v470
    %604 = vmatprep.subr.bf16.mxu0 0
    %605 = vmatpush2.bf16.msra.mxu0 %v469
    %606 = vmatprep.subr.bf16.mxu0 0
    %607 = vmatpush2.bf16.msra.mxu0 %v468
    %608 = vmatprep.subr.bf16.mxu0 0
    %609 = vmatpush2.bf16.msra.mxu0 %v467
    %610 = vmatprep.subr.bf16.mxu0 0
    %611 = vmatpush2.bf16.msra.mxu0 %v466
    %612 = vmatprep.subr.bf16.mxu0 0
    %613 = vmatpush2.bf16.msra.mxu0 %v465
    %614 = vmatprep.subr.bf16.mxu0 0
    %615 = vmatpush2.bf16.msra.mxu0 %v464
    %616 = vmatprep.mubr.bf16.mxu0 %v180
    %617 = vmatmul.mubr.bf16.gmra.mxu0 %v166
    %v618 = vpop.f32.mrf.mxu0
    %v619 = vadd.f32 0.0, %v618
    %v620 = vpop.f32.mrf.mxu0
    %v621 = vpop.f32.mrf.mxu0
    %v622 = vpop.f32.mrf.mxu0
    %623 = vdwg.mxu0
    %624 = vmatprep.subr.bf16.mxu0 0
    %625 = vmatpush1.bf16.msra.mxu0 %v479
    %626 = vmatprep.subr.bf16.mxu0 0
    %627 = vmatpush1.bf16.msra.mxu0 %v478
    %628 = vmatprep.subr.bf16.mxu0 0
    %629 = vmatpush1.bf16.msra.mxu0 %v477
    %630 = vmatprep.subr.bf16.mxu0 0
    %631 = vmatpush1.bf16.msra.mxu0 %v476
    %632 = vmatprep.subr.bf16.mxu0 0
    %633 = vmatpush1.bf16.msra.mxu0 %v475
    %634 = vmatprep.subr.bf16.mxu0 0
    %635 = vmatpush1.bf16.msra.mxu0 %v474
    %636 = vmatprep.subr.bf16.mxu0 0
    %637 = vmatpush1.bf16.msra.mxu0 %v473
    %638 = vmatprep.subr.bf16.mxu0 0
    %639 = vmatpush1.bf16.msra.mxu0 %v472
    %640 = vmatprep.subr.bf16.mxu0 0
    %641 = vmatpush2.bf16.msra.mxu0 %v487
    %642 = vmatprep.subr.bf16.mxu0 0
    %643 = vmatpush2.bf16.msra.mxu0 %v486
    %644 = vmatprep.subr.bf16.mxu0 0
    %645 = vmatpush2.bf16.msra.mxu0 %v485
    %646 = vmatprep.subr.bf16.mxu0 0
    %647 = vmatpush2.bf16.msra.mxu0 %v484
    %648 = vmatprep.subr.bf16.mxu0 0
    %649 = vmatpush2.bf16.msra.mxu0 %v483
    %650 = vmatprep.subr.bf16.mxu0 0
    %651 = vmatpush2.bf16.msra.mxu0 %v482
    %652 = vmatprep.subr.bf16.mxu0 0
    %653 = vmatpush2.bf16.msra.mxu0 %v481
    %654 = vmatprep.subr.bf16.mxu0 0
    %655 = vmatpush2.bf16.msra.mxu0 %v480
    %656 = vmatprep.mubr.bf16.mxu0 %v190
    %657 = vmatmul.mubr.bf16.gmra.mxu0 %v188
    %v658 = vpop.f32.mrf.mxu0
    %v659 = vadd.f32 %v619, %v658
    %v660 = vpop.f32.mrf.mxu0
    %v661 = vpop.f32.mrf.mxu0
    %v662 = vpop.f32.mrf.mxu0
    %663 = vdwg.mxu0
    %664 = vmatprep.subr.bf16.mxu0 0
    %665 = vmatpush1.bf16.msra.mxu0 %v495
    %666 = vmatprep.subr.bf16.mxu0 0
    %667 = vmatpush1.bf16.msra.mxu0 %v494
    %668 = vmatprep.subr.bf16.mxu0 0
    %669 = vmatpush1.bf16.msra.mxu0 %v493
    %670 = vmatprep.subr.bf16.mxu0 0
    %671 = vmatpush1.bf16.msra.mxu0 %v492
    %672 = vmatprep.subr.bf16.mxu0 0
    %673 = vmatpush1.bf16.msra.mxu0 %v491
    %674 = vmatprep.subr.bf16.mxu0 0
    %675 = vmatpush1.bf16.msra.mxu0 %v490
    %676 = vmatprep.subr.bf16.mxu0 0
    %677 = vmatpush1.bf16.msra.mxu0 %v489
    %678 = vmatprep.subr.bf16.mxu0 0
    %679 = vmatpush1.bf16.msra.mxu0 %v488
    %680 = vmatprep.subr.bf16.mxu0 0
    %681 = vmatpush2.bf16.msra.mxu0 %v503
    %682 = vmatprep.subr.bf16.mxu0 0
    %683 = vmatpush2.bf16.msra.mxu0 %v502
    %684 = vmatprep.subr.bf16.mxu0 0
    %685 = vmatpush2.bf16.msra.mxu0 %v501
    %686 = vmatprep.subr.bf16.mxu0 0
    %687 = vmatpush2.bf16.msra.mxu0 %v500
    %688 = vmatprep.subr.bf16.mxu0 0
    %689 = vmatpush2.bf16.msra.mxu0 %v499
    %690 = vmatprep.subr.bf16.mxu0 0
    %691 = vmatpush2.bf16.msra.mxu0 %v498
    %692 = vmatprep.subr.bf16.mxu0 0
    %693 = vmatpush2.bf16.msra.mxu0 %v497
    %694 = vmatprep.subr.bf16.mxu0 0
    %695 = vmatpush2.bf16.msra.mxu0 %v496
    %696 = vmatprep.mubr.bf16.mxu0 %v187
    %697 = vmatmul.mubr.bf16.gmra.mxu0 %v173
    %v698 = vpop.f32.mrf.mxu0
    %v699 = vadd.f32 %v659, %v698
    %v700 = vpop.f32.mrf.mxu0
    %v701 = vpop.f32.mrf.mxu0
    %v702 = vpop.f32.mrf.mxu0
    %703 = vdwg.mxu0
    %704 = vmatprep.subr.bf16.mxu0 0
    %705 = vmatpush1.bf16.msra.mxu0 %v511
    %706 = vmatprep.subr.bf16.mxu0 0
    %707 = vmatpush1.bf16.msra.mxu0 %v510
    %708 = vmatprep.subr.bf16.mxu0 0
    %709 = vmatpush1.bf16.msra.mxu0 %v509
    %710 = vmatprep.subr.bf16.mxu0 0
    %711 = vmatpush1.bf16.msra.mxu0 %v508
    %712 = vmatprep.subr.bf16.mxu0 0
    %713 = vmatpush1.bf16.msra.mxu0 %v507
    %714 = vmatprep.subr.bf16.mxu0 0
    %715 = vmatpush1.bf16.msra.mxu0 %v506
    %716 = vmatprep.subr.bf16.mxu0 0
    %717 = vmatpush1.bf16.msra.mxu0 %v505
    %718 = vmatprep.subr.bf16.mxu0 0
    %719 = vmatpush1.bf16.msra.mxu0 %v504
    %720 = vmatprep.subr.bf16.mxu0 0
    %721 = vmatpush2.bf16.msra.mxu0 %v519
    %722 = vmatprep.subr.bf16.mxu0 0
    %723 = vmatpush2.bf16.msra.mxu0 %v518
    %724 = vmatprep.subr.bf16.mxu0 0
    %725 = vmatpush2.bf16.msra.mxu0 %v517
    %726 = vmatprep.subr.bf16.mxu0 0
    %727 = vmatpush2.bf16.msra.mxu0 %v516
    %728 = vmatprep.subr.bf16.mxu0 0
    %729 = vmatpush2.bf16.msra.mxu0 %v515
    %730 = vmatprep.subr.bf16.mxu0 0
    %731 = vmatpush2.bf16.msra.mxu0 %v514
    %732 = vmatprep.subr.bf16.mxu0 0
    %733 = vmatpush2.bf16.msra.mxu0 %v513
    %734 = vmatprep.subr.bf16.mxu0 0
    %735 = vmatpush2.bf16.msra.mxu0 %v512
    %736 = vmatprep.mubr.bf16.mxu0 %v191
    %737 = vmatmul.mubr.bf16.gmra.mxu0 %v189
    %v738 = vpop.f32.mrf.mxu0
    %v739 = vadd.f32 %v699, %v738
    %v740 = vpop.f32.mrf.mxu0
    %v741 = vpop.f32.mrf.mxu0
    %v742 = vpop.f32.mrf.mxu0
    %743 = vdwg.mxu0
    %v744 = vxor.u32 %v739, 2147483648
    %v745 = vmul.f32 %v744, 1.442695
    %v746 = vpow.pop %v745
    %v747 = vadd.f32 %v746, 1.0
    %v748 = vrcp.pop %v747
    %v749 = vmul.f32 1.0, %v748
    %vm750 = vcmask 8192
    %751 = vst.msk [vmem:[#allocation2] sm:$0x1] %vm750, %v749
    // Predicated region
    $region10: #{discriminator_forward.9} parent=1 // pred_check
      _
    $region11: #{discriminator_forward.9} parent=1 // pred_check_branch
      %753 = sbr.rel (0) target = $region13
    $region12: #{discriminator_forward.9} parent=1 // pred_region
      %s755 = ssub.s32 16, 16
      %756 = vsyncadd [#allocation3], %s755
      %s758 = sshll.u32 [#allocation2], 4
      %s759 = int_to_ptr.vmem [resolvable:$true] %s758
      %761 = dma.vmem_to_hbm [thread:$0]  %s759, 16, %s2, [#allocation3]
    $region13: #{discriminator_forward.9} parent=1 // pred_fallthru
      _
    // Predicated region
    $region14: #{discriminator_forward.9} parent=1 // pred_check
      _
    $region15: #{discriminator_forward.9} parent=1 // pred_check_branch
      %763 = sbr.rel (0) target = $region17
    $region16: #{discriminator_forward.9} parent=1 // pred_region
      %764 = dma.done [#allocation3], 16
    $region17: #{discriminator_forward.9} parent=1 // pred_fallthru
      _
    %765 = vsyncpa [#allocation3], 1

</llo_original>
